<compile_context>
chip_gen: v6e
topology: v6e:2x2x1
jax: 0.10.0
libtpu: 0.0.40
codegen_flags: <defaults>
</compile_context>

<pallas_src>
import jax
import jax.numpy as jnp
from jax.experimental import pallas as pl
from jax.experimental.pallas import tpu as pltpu

# ---------------------------------------------------------------------------
# Small, self-consistent configuration (scaled-down NeRF, typ='fine',
# encode_appearance=True, output_random=True).
# ---------------------------------------------------------------------------
D = 8            # number of xyz encoding layers
W = 64           # hidden width            (original: 256)
W_HALF = W // 2  # dir-encoding width      (original: 128)
SKIPS = (4,)
IN_XYZ = 32      # in_channels_xyz         (original: 63)
IN_DIR = 16      # in_channels_dir         (original: 27)
IN_A = 16        # in_channels_a           (original: 48)
NERF_OUT = 3     # args.nerf_out_dim
C_IN = IN_XYZ + IN_DIR + 2 * IN_A          # 80
C_OUT = 2 * NERF_OUT                       # 6

# Column layout of the fused x-projection  y = x @ Wx :
#   y[:, 0:W]        -> layer-0 pre-activation (x part)
#   y[:, W:2W]       -> skip-layer pre-activation (x part)
#   y[:, 2W:2W+2*Wh] -> dir-encoding pre-activation (x part, [real | random])
Y_WIDTH = 2 * W + 2 * W_HALF               # 192


# ---------------------------------------------------------------------------
# Weight / bias slab layout (row offsets are all multiples of 16 -> clean
# bf16 sublane tiling).
# ---------------------------------------------------------------------------
def _build_slab_layout():
    layout = {}
    off = 0

    def add(name, din, dout):
        nonlocal off
        layout[name] = (off, din, dout)
        off += din

    add("xfuse", C_IN, Y_WIDTH)           # fused x-projection weight
    for i in (1, 2, 3):
        add(f"l{i}", W, W)
    add("skip_h", W, W)                   # skip layer, h rows of W4
    for i in (5, 6, 7):
        add(f"l{i}", W, W)
    add("final", W, W)                    # xyz_encoding_final
    add("dir_h", W, 2 * W_HALF)           # dir encoding, xyz_final rows (2 heads)
    add("rgb", 2 * W_HALF, 2 * NERF_OUT)  # block-diagonal rgb head (2 heads)
    return layout, off


_W_LAYOUT, _W_ROWS = _build_slab_layout()   # _W_ROWS = 720
_W_COLS = Y_WIDTH                           # widest dout (192)

_B_ROWS = {"l0": (0, W), "l1": (1, W), "l2": (2, W), "l3": (3, W),
           "skip": (4, W), "l5": (5, W), "l6": (6, W), "l7": (7, W),
           "final": (8, W), "dir": (9, 2 * W_HALF), "rgb": (10, 2 * NERF_OUT)}
_B_SLAB_SHAPE = (16, 128)


# ---------------------------------------------------------------------------
# Pallas kernel: one tile of rows; the two packed slabs are resident.
# ---------------------------------------------------------------------------
def _nerf_kernel(x_ref, ws_ref, bs_ref, o_ref):
    cdt = ws_ref.dtype                       # MXU operand dtype (bf16 or f32)
    x = x_ref[...].astype(cdt)               # in-kernel cast (VPU slack)

    def wslab(name):
        off, din, dout = _W_LAYOUT[name]
        return ws_ref[off:off + din, :dout]

    def bias(name):
        row, width = _B_ROWS[name]
        return bs_ref[row:row + 1, :width]   # (1, width) fp32

    def dot32(a, w):
        return jnp.dot(a, w, preferred_element_type=jnp.float32)

    # ---- single fused MXU chain for every x-LHS projection
    y = dot32(x, wslab("xfuse"))             # (tile, 192) fp32

    # ---- xyz trunk
    h = jnp.maximum(y[:, :W] + bias("l0"), 0.0)
    for name in ("l1", "l2", "l3"):
        h = jnp.maximum(dot32(h.astype(cdt), wslab(name)) + bias(name), 0.0)

    # skip layer (i == 4): cat([input_xyz, h]) @ W4 == y[:, W:2W] + h @ W4_h
    h = jnp.maximum(dot32(h.astype(cdt), wslab("skip_h"))
                    + y[:, W:2 * W] + bias("skip"), 0.0)

    for name in ("l5", "l6", "l7"):
        h = jnp.maximum(dot32(h.astype(cdt), wslab(name)) + bias(name), 0.0)

    # ---- xyz_encoding_final (Linear, no activation)
    xyz_final = dot32(h.astype(cdt), wslab("final")) + bias("final")

    # ---- fused dir encoding for BOTH appearance heads ([real | random])
    de = jnp.maximum(dot32(xyz_final.astype(cdt), wslab("dir_h"))
                     + y[:, 2 * W:] + bias("dir"), 0.0)

    # ---- fused block-diagonal rgb head -> (tile, 2*NERF_OUT)
    rgb = jax.nn.sigmoid(dot32(de.astype(cdt), wslab("rgb")) + bias("rgb"))
    o_ref[...] = rgb.astype(o_ref.dtype)


# ---------------------------------------------------------------------------
# Host-side weight repacking into two slabs.
# ---------------------------------------------------------------------------
def pack_params(params, compute_dtype):
    """Repack PyTorch-layout params into one weight slab (compute_dtype) and
    one bias slab (fp32)."""
    ws = jnp.zeros((_W_ROWS, _W_COLS), jnp.float32)
    bs = jnp.zeros(_B_SLAB_SHAPE, jnp.float32)

    w0, b0 = params[0]          # (IN_XYZ, W)
    w4, b4 = params[4]          # (IN_XYZ + W, W), rows = [input_xyz ; h]
    wf, bf = params[D]          # (W, W)
    wd, bd = params[D + 1]      # (W + IN_DIR + IN_A, W_HALF)
    wr, br = params[D + 2]      # (W_HALF, NERF_OUT)

    # --- fused x-projection weight (rows = x channels, zero where unused)
    off, _, _ = _W_LAYOUT["xfuse"]
    ws = ws.at[off:off + IN_XYZ, 0:W].set(w0)                       # layer 0
    ws = ws.at[off:off + IN_XYZ, W:2 * W].set(w4[:IN_XYZ])          # skip (x part)
    wdir = wd[W:W + IN_DIR]                                         # (IN_DIR, W_HALF)
    wa = wd[W + IN_DIR:]                                            # (IN_A, W_HALF)
    c0 = 2 * W
    r_dir = off + IN_XYZ
    r_a = off + IN_XYZ + IN_DIR
    r_ra = off + IN_XYZ + IN_DIR + IN_A
    ws = ws.at[r_dir:r_dir + IN_DIR, c0:c0 + W_HALF].set(wdir)          # real head
    ws = ws.at[r_dir:r_dir + IN_DIR, c0 + W_HALF:c0 + 2 * W_HALF].set(wdir)  # rand head
    ws = ws.at[r_a:r_a + IN_A, c0:c0 + W_HALF].set(wa)                  # real a
    ws = ws.at[r_ra:r_ra + IN_A, c0 + W_HALF:c0 + 2 * W_HALF].set(wa)   # random a

    # --- plain hidden layers
    for i in (1, 2, 3, 5, 6, 7):
        w, b = params[i]
        off_i, din, dout = _W_LAYOUT[f"l{i}"]
        ws = ws.at[off_i:off_i + din, :dout].set(w)
        row, width = _B_ROWS[f"l{i}"]
        bs = bs.at[row, :width].set(b[0])

    # --- skip layer, h rows
    off_s, din_s, dout_s = _W_LAYOUT["skip_h"]
    ws = ws.at[off_s:off_s + din_s, :dout_s].set(w4[IN_XYZ:])

    # --- xyz_encoding_final
    off_f, din_f, dout_f = _W_LAYOUT["final"]
    ws = ws.at[off_f:off_f + din_f, :dout_f].set(wf)

    # --- dir encoding, xyz_final rows, duplicated for both heads
    off_d, _, _ = _W_LAYOUT["dir_h"]
    ws = ws.at[off_d:off_d + W, :W_HALF].set(wd[:W])
    ws = ws.at[off_d:off_d + W, W_HALF:2 * W_HALF].set(wd[:W])

    # --- block-diagonal rgb head
    off_r, _, _ = _W_LAYOUT["rgb"]
    ws = ws.at[off_r:off_r + W_HALF, :NERF_OUT].set(wr)
    ws = ws.at[off_r + W_HALF:off_r + 2 * W_HALF, NERF_OUT:2 * NERF_OUT].set(wr)

    # --- remaining biases (dir / rgb duplicated across heads)
    bs = bs.at[_B_ROWS["l0"][0], :W].set(b0[0])
    bs = bs.at[_B_ROWS["skip"][0], :W].set(b4[0])
    bs = bs.at[_B_ROWS["final"][0], :W].set(bf[0])
    bs = bs.at[_B_ROWS["dir"][0], :W_HALF].set(bd[0])
    bs = bs.at[_B_ROWS["dir"][0], W_HALF:2 * W_HALF].set(bd[0])
    bs = bs.at[_B_ROWS["rgb"][0], :NERF_OUT].set(br[0])
    bs = bs.at[_B_ROWS["rgb"][0], NERF_OUT:2 * NERF_OUT].set(br[0])

    return ws.astype(compute_dtype), bs


# ---------------------------------------------------------------------------
# Row-tile selection: multiple of 8, >= 2 grid steps when possible, prefer an
# even step count (v7x has 2 TensorCores per chip).
# ---------------------------------------------------------------------------
def _choose_tile(n, tile_n):
    r8 = lambda v: ((v + 7) // 8) * 8
    tile_n = max(8, (tile_n // 8) * 8)
    tile_n = min(tile_n, r8(n))                      # no point exceeding N
    if n > 8:
        tile_n = min(tile_n, r8(pl.cdiv(n, 2)))      # >= 2 grid steps
    steps = pl.cdiv(n, tile_n)
    if steps > 1 and steps % 2 == 1:                 # best-effort even grid
        cand = r8(pl.cdiv(n, steps + 1))
        if cand >= 8 and pl.cdiv(n, cand) % 2 == 0:
            tile_n = cand
    return tile_n


# ---------------------------------------------------------------------------
# Wrapper
# ---------------------------------------------------------------------------
def nerf_forward(x, params, *, tile_n=4096, use_bf16=True):
    N, C = x.shape
    assert C == C_IN
    # use_bf16=False is a debug path only: fp32 MXU operands lower to slow
    # multi-pass emulation on all TPU generations.
    cdt = jnp.bfloat16 if use_bf16 else jnp.float32

    ws, bs = pack_params(params, cdt)
    tile_n = _choose_tile(N, tile_n)

    out = pl.pallas_call(
        _nerf_kernel,
        out_shape=jax.ShapeDtypeStruct((N, C_OUT), x.dtype),
        grid_spec=pltpu.PrefetchScalarGridSpec(
            num_scalar_prefetch=0,
            grid=(pl.cdiv(N, tile_n),),
            in_specs=[
                pl.BlockSpec((tile_n, C_IN), lambda i: (i, 0)),   # x (orig dtype)
                pl.BlockSpec(ws.shape, lambda i: (0, 0)),         # weight slab
                pl.BlockSpec(bs.shape, lambda i: (0, 0)),         # bias slab
            ],
            out_specs=pl.BlockSpec((tile_n, C_OUT), lambda i: (i, 0)),
        ),
        compiler_params=pltpu.CompilerParams(
            dimension_semantics=("parallel",),
            vmem_limit_bytes=32 * 1024 * 1024,
        ),
    )(x, ws, bs)
    return out


# ---------------------------------------------------------------------------
# Deterministic parameter construction + pure-JAX reference
# ---------------------------------------------------------------------------
def make_params(key):
    """Returns list of (weight(in,out), bias(1,out)) in PyTorch-layer order."""
    params = []
    layer_dims = []
    for i in range(D):
        if i == 0:
            layer_dims.append((IN_XYZ, W))
        elif i in SKIPS:
            layer_dims.append((IN_XYZ + W, W))   # cat([xyz, h]) row order
        else:
            layer_dims.append((W, W))
    layer_dims.append((W, W))                                  # xyz_encoding_final
    layer_dims.append((W + IN_DIR + IN_A, W_HALF))             # dir_encoding
    layer_dims.append((W_HALF, NERF_OUT))                      # static_rgb

    keys = jax.random.split(key, 2 * len(layer_dims))
    for li, (din, dout) in enumerate(layer_dims):
        kw, kb = keys[2 * li], keys[2 * li + 1]
        scale = 1.0 / jnp.sqrt(jnp.float32(din))
        w = jax.random.normal(kw, (din, dout), jnp.float32) * scale
        b = jax.random.normal(kb, (1, dout), jnp.float32) * 0.01
        params.append((w, b))
    return params


def nerf_reference(x, params):
    """Plain-JAX fp32 mirror of the PyTorch forward (output_random=True)."""
    input_xyz = x[:, :IN_XYZ]
    input_dir = x[:, IN_XYZ:IN_XYZ + IN_DIR]
    input_a = x[:, IN_XYZ + IN_DIR:IN_XYZ + IN_DIR + IN_A]
    input_rand_a = x[:, IN_XYZ + IN_DIR + IN_A:]
    input_dir_a = jnp.concatenate([input_dir, input_a], -1)
    input_dir_a_rand = jnp.concatenate([input_dir, input_rand_a], -1)

    h = input_xyz
    for i in range(D):
        w, b = params[i]
        if i in SKIPS:
            h = jnp.concatenate([input_xyz, h], -1)
        h = jax.nn.relu(h @ w + b)
    w_f, b_f = params[D]
    xyz_final = h @ w_f + b_f

    w_dir, b_dir = params[D + 1]
    w_rgb, b_rgb = params[D + 2]

    def head(dir_a):
        de = jax.nn.relu(jnp.concatenate([xyz_final, dir_a], -1) @ w_dir + b_dir)
        return jax.nn.sigmoid(de @ w_rgb + b_rgb)

    return jnp.concatenate([head(input_dir_a), head(input_dir_a_rand)], -1)


# ---------------------------------------------------------------------------
if __name__ == "__main__":
    key = jax.random.PRNGKey(0)
    k_x, k_p = jax.random.split(key)

    N = 128
    x = jax.random.normal(k_x, (N, C_IN), jnp.float32)
    params = make_params(k_p)

    out = nerf_forward(x, params)           # tile clamps to 64 -> 2 grid steps
    out = jax.block_until_ready(out)

    ref = jax.block_until_ready(nerf_reference(x, params))
    assert out.shape == (N, C_OUT)
    # bf16 MXU operands (fp32 accumulation): loose-but-meaningful tolerance on
    # sigmoid outputs in (0, 1).
    assert jnp.allclose(out, ref, atol=3e-2, rtol=3e-2), "mismatch vs reference"

    print("KERNEL_OK")
</pallas_src>

<mosaic_0001>
module attributes {stable_mosaic.version = 11 : i64} {
  func.func @_nerf_kernel(%arg0: i32, %arg1: memref<64x80xf32, #tpu.memory_space<vmem>>, %arg2: memref<720x192xbf16, #tpu.memory_space<vmem>>, %arg3: memref<16x128xf32, #tpu.memory_space<vmem>>, %arg4: memref<64x6xf32, #tpu.memory_space<vmem>>) attributes {dimension_semantics = [#tpu.dimension_semantics<parallel>], iteration_bounds = array<i64: 2>, scalar_prefetch = 0 : i64, scratch_operands = 0 : i64, tpu.core_type = #tpu.core_type<tc>, window_params = [{transform_indices = @transform_0, window_bounds = array<i64: 64, 80>}, {pipeline_mode = #tpu.pipeline_mode<synchronous>, transform_indices = @transform_1, window_bounds = array<i64: 720, 192>}, {pipeline_mode = #tpu.pipeline_mode<synchronous>, transform_indices = @transform_2, window_bounds = array<i64: 16, 128>}, {transform_indices = @transform_3, window_bounds = array<i64: 64, 6>}]} {
    %c0 = arith.constant 0 : index
    %c0_0 = arith.constant 0 : index
    %0 = vector.load %arg1[%c0, %c0_0] : memref<64x80xf32, #tpu.memory_space<vmem>>, vector<64x80xf32>
    %1 = arith.truncf %0 : vector<64x80xf32> to vector<64x80xbf16>
    %c0_1 = arith.constant 0 : index
    %c0_2 = arith.constant 0 : index
    %2 = vector.load %arg2[%c0_1, %c0_2] : memref<720x192xbf16, #tpu.memory_space<vmem>>, vector<80x192xbf16>
    %cst = arith.constant dense<0.000000e+00> : vector<64x192xf32>
    %3 = tpu.matmul %1, %2, %cst {dimension_numbers = #tpu.dot_dimension_numbers<[1], [0], [0], [1], [0, 0, 1, 1], [], []>} : vector<64x80xbf16>, vector<80x192xbf16>, vector<64x192xf32> -> vector<64x192xf32>
    %4 = vector.extract_strided_slice %3 {offsets = [0, 0], sizes = [64, 64], strides = [1, 1]} : vector<64x192xf32> to vector<64x64xf32>
    %c0_3 = arith.constant 0 : index
    %c0_4 = arith.constant 0 : index
    %5 = vector.load %arg3[%c0_3, %c0_4] : memref<16x128xf32, #tpu.memory_space<vmem>>, vector<1x64xf32>
    %6 = vector.broadcast %5 : vector<1x64xf32> to vector<64x64xf32>
    %7 = arith.addf %4, %6 : vector<64x64xf32>
    %cst_5 = arith.constant 0.000000e+00 : f32
    %8 = vector.broadcast %cst_5 : f32 to vector<64x64xf32>
    %9 = arith.maximumf %7, %8 : vector<64x64xf32>
    %10 = arith.truncf %9 : vector<64x64xf32> to vector<64x64xbf16>
    %c80 = arith.constant 80 : index
    %c0_6 = arith.constant 0 : index
    %11 = vector.load %arg2[%c80, %c0_6] : memref<720x192xbf16, #tpu.memory_space<vmem>>, vector<64x64xbf16>
    %cst_7 = arith.constant dense<0.000000e+00> : vector<64x64xf32>
    %12 = tpu.matmul %10, %11, %cst_7 {dimension_numbers = #tpu.dot_dimension_numbers<[1], [0], [0], [1], [0, 0, 1, 1], [], []>} : vector<64x64xbf16>, vector<64x64xbf16>, vector<64x64xf32> -> vector<64x64xf32>
    %c1 = arith.constant 1 : index
    %c0_8 = arith.constant 0 : index
    %13 = vector.load %arg3[%c1, %c0_8] : memref<16x128xf32, #tpu.memory_space<vmem>>, vector<1x64xf32>
    %14 = vector.broadcast %13 : vector<1x64xf32> to vector<64x64xf32>
    %15 = arith.addf %12, %14 : vector<64x64xf32>
    %cst_9 = arith.constant 0.000000e+00 : f32
    %16 = vector.broadcast %cst_9 : f32 to vector<64x64xf32>
    %17 = arith.maximumf %15, %16 : vector<64x64xf32>
    %18 = arith.truncf %17 : vector<64x64xf32> to vector<64x64xbf16>
    %c144 = arith.constant 144 : index
    %c0_10 = arith.constant 0 : index
    %19 = vector.load %arg2[%c144, %c0_10] : memref<720x192xbf16, #tpu.memory_space<vmem>>, vector<64x64xbf16>
    %cst_11 = arith.constant dense<0.000000e+00> : vector<64x64xf32>
    %20 = tpu.matmul %18, %19, %cst_11 {dimension_numbers = #tpu.dot_dimension_numbers<[1], [0], [0], [1], [0, 0, 1, 1], [], []>} : vector<64x64xbf16>, vector<64x64xbf16>, vector<64x64xf32> -> vector<64x64xf32>
    %c2 = arith.constant 2 : index
    %c0_12 = arith.constant 0 : index
    %21 = vector.load %arg3[%c2, %c0_12] : memref<16x128xf32, #tpu.memory_space<vmem>>, vector<1x64xf32>
    %22 = vector.broadcast %21 : vector<1x64xf32> to vector<64x64xf32>
    %23 = arith.addf %20, %22 : vector<64x64xf32>
    %cst_13 = arith.constant 0.000000e+00 : f32
    %24 = vector.broadcast %cst_13 : f32 to vector<64x64xf32>
    %25 = arith.maximumf %23, %24 : vector<64x64xf32>
    %26 = arith.truncf %25 : vector<64x64xf32> to vector<64x64xbf16>
    %c208 = arith.constant 208 : index
    %c0_14 = arith.constant 0 : index
    %27 = vector.load %arg2[%c208, %c0_14] : memref<720x192xbf16, #tpu.memory_space<vmem>>, vector<64x64xbf16>
    %cst_15 = arith.constant dense<0.000000e+00> : vector<64x64xf32>
    %28 = tpu.matmul %26, %27, %cst_15 {dimension_numbers = #tpu.dot_dimension_numbers<[1], [0], [0], [1], [0, 0, 1, 1], [], []>} : vector<64x64xbf16>, vector<64x64xbf16>, vector<64x64xf32> -> vector<64x64xf32>
    %c3 = arith.constant 3 : index
    %c0_16 = arith.constant 0 : index
    %29 = vector.load %arg3[%c3, %c0_16] : memref<16x128xf32, #tpu.memory_space<vmem>>, vector<1x64xf32>
    %30 = vector.broadcast %29 : vector<1x64xf32> to vector<64x64xf32>
    %31 = arith.addf %28, %30 : vector<64x64xf32>
    %cst_17 = arith.constant 0.000000e+00 : f32
    %32 = vector.broadcast %cst_17 : f32 to vector<64x64xf32>
    %33 = arith.maximumf %31, %32 : vector<64x64xf32>
    %34 = arith.truncf %33 : vector<64x64xf32> to vector<64x64xbf16>
    %c272 = arith.constant 272 : index
    %c0_18 = arith.constant 0 : index
    %35 = vector.load %arg2[%c272, %c0_18] : memref<720x192xbf16, #tpu.memory_space<vmem>>, vector<64x64xbf16>
    %cst_19 = arith.constant dense<0.000000e+00> : vector<64x64xf32>
    %36 = tpu.matmul %34, %35, %cst_19 {dimension_numbers = #tpu.dot_dimension_numbers<[1], [0], [0], [1], [0, 0, 1, 1], [], []>} : vector<64x64xbf16>, vector<64x64xbf16>, vector<64x64xf32> -> vector<64x64xf32>
    %37 = vector.extract_strided_slice %3 {offsets = [0, 64], sizes = [64, 64], strides = [1, 1]} : vector<64x192xf32> to vector<64x64xf32>
    %38 = arith.addf %36, %37 : vector<64x64xf32>
    %c4 = arith.constant 4 : index
    %c0_20 = arith.constant 0 : index
    %39 = vector.load %arg3[%c4, %c0_20] : memref<16x128xf32, #tpu.memory_space<vmem>>, vector<1x64xf32>
    %40 = vector.broadcast %39 : vector<1x64xf32> to vector<64x64xf32>
    %41 = arith.addf %38, %40 : vector<64x64xf32>
    %cst_21 = arith.constant 0.000000e+00 : f32
    %42 = vector.broadcast %cst_21 : f32 to vector<64x64xf32>
    %43 = arith.maximumf %41, %42 : vector<64x64xf32>
    %44 = arith.truncf %43 : vector<64x64xf32> to vector<64x64xbf16>
    %c336 = arith.constant 336 : index
    %c0_22 = arith.constant 0 : index
    %45 = vector.load %arg2[%c336, %c0_22] : memref<720x192xbf16, #tpu.memory_space<vmem>>, vector<64x64xbf16>
    %cst_23 = arith.constant dense<0.000000e+00> : vector<64x64xf32>
    %46 = tpu.matmul %44, %45, %cst_23 {dimension_numbers = #tpu.dot_dimension_numbers<[1], [0], [0], [1], [0, 0, 1, 1], [], []>} : vector<64x64xbf16>, vector<64x64xbf16>, vector<64x64xf32> -> vector<64x64xf32>
    %c5 = arith.constant 5 : index
    %c0_24 = arith.constant 0 : index
    %47 = vector.load %arg3[%c5, %c0_24] : memref<16x128xf32, #tpu.memory_space<vmem>>, vector<1x64xf32>
    %48 = vector.broadcast %47 : vector<1x64xf32> to vector<64x64xf32>
    %49 = arith.addf %46, %48 : vector<64x64xf32>
    %cst_25 = arith.constant 0.000000e+00 : f32
    %50 = vector.broadcast %cst_25 : f32 to vector<64x64xf32>
    %51 = arith.maximumf %49, %50 : vector<64x64xf32>
    %52 = arith.truncf %51 : vector<64x64xf32> to vector<64x64xbf16>
    %c400 = arith.constant 400 : index
    %c0_26 = arith.constant 0 : index
    %53 = vector.load %arg2[%c400, %c0_26] : memref<720x192xbf16, #tpu.memory_space<vmem>>, vector<64x64xbf16>
    %cst_27 = arith.constant dense<0.000000e+00> : vector<64x64xf32>
    %54 = tpu.matmul %52, %53, %cst_27 {dimension_numbers = #tpu.dot_dimension_numbers<[1], [0], [0], [1], [0, 0, 1, 1], [], []>} : vector<64x64xbf16>, vector<64x64xbf16>, vector<64x64xf32> -> vector<64x64xf32>
    %c6 = arith.constant 6 : index
    %c0_28 = arith.constant 0 : index
    %55 = vector.load %arg3[%c6, %c0_28] : memref<16x128xf32, #tpu.memory_space<vmem>>, vector<1x64xf32>
    %56 = vector.broadcast %55 : vector<1x64xf32> to vector<64x64xf32>
    %57 = arith.addf %54, %56 : vector<64x64xf32>
    %cst_29 = arith.constant 0.000000e+00 : f32
    %58 = vector.broadcast %cst_29 : f32 to vector<64x64xf32>
    %59 = arith.maximumf %57, %58 : vector<64x64xf32>
    %60 = arith.truncf %59 : vector<64x64xf32> to vector<64x64xbf16>
    %c464 = arith.constant 464 : index
    %c0_30 = arith.constant 0 : index
    %61 = vector.load %arg2[%c464, %c0_30] : memref<720x192xbf16, #tpu.memory_space<vmem>>, vector<64x64xbf16>
    %cst_31 = arith.constant dense<0.000000e+00> : vector<64x64xf32>
    %62 = tpu.matmul %60, %61, %cst_31 {dimension_numbers = #tpu.dot_dimension_numbers<[1], [0], [0], [1], [0, 0, 1, 1], [], []>} : vector<64x64xbf16>, vector<64x64xbf16>, vector<64x64xf32> -> vector<64x64xf32>
    %c7 = arith.constant 7 : index
    %c0_32 = arith.constant 0 : index
    %63 = vector.load %arg3[%c7, %c0_32] : memref<16x128xf32, #tpu.memory_space<vmem>>, vector<1x64xf32>
    %64 = vector.broadcast %63 : vector<1x64xf32> to vector<64x64xf32>
    %65 = arith.addf %62, %64 : vector<64x64xf32>
    %cst_33 = arith.constant 0.000000e+00 : f32
    %66 = vector.broadcast %cst_33 : f32 to vector<64x64xf32>
    %67 = arith.maximumf %65, %66 : vector<64x64xf32>
    %68 = arith.truncf %67 : vector<64x64xf32> to vector<64x64xbf16>
    %c528 = arith.constant 528 : index
    %c0_34 = arith.constant 0 : index
    %69 = vector.load %arg2[%c528, %c0_34] : memref<720x192xbf16, #tpu.memory_space<vmem>>, vector<64x64xbf16>
    %cst_35 = arith.constant dense<0.000000e+00> : vector<64x64xf32>
    %70 = tpu.matmul %68, %69, %cst_35 {dimension_numbers = #tpu.dot_dimension_numbers<[1], [0], [0], [1], [0, 0, 1, 1], [], []>} : vector<64x64xbf16>, vector<64x64xbf16>, vector<64x64xf32> -> vector<64x64xf32>
    %c8 = arith.constant 8 : index
    %c0_36 = arith.constant 0 : index
    %71 = vector.load %arg3[%c8, %c0_36] : memref<16x128xf32, #tpu.memory_space<vmem>>, vector<1x64xf32>
    %72 = vector.broadcast %71 : vector<1x64xf32> to vector<64x64xf32>
    %73 = arith.addf %70, %72 : vector<64x64xf32>
    %74 = arith.truncf %73 : vector<64x64xf32> to vector<64x64xbf16>
    %c592 = arith.constant 592 : index
    %c0_37 = arith.constant 0 : index
    %75 = vector.load %arg2[%c592, %c0_37] : memref<720x192xbf16, #tpu.memory_space<vmem>>, vector<64x64xbf16>
    %cst_38 = arith.constant dense<0.000000e+00> : vector<64x64xf32>
    %76 = tpu.matmul %74, %75, %cst_38 {dimension_numbers = #tpu.dot_dimension_numbers<[1], [0], [0], [1], [0, 0, 1, 1], [], []>} : vector<64x64xbf16>, vector<64x64xbf16>, vector<64x64xf32> -> vector<64x64xf32>
    %77 = vector.extract_strided_slice %3 {offsets = [0, 128], sizes = [64, 64], strides = [1, 1]} : vector<64x192xf32> to vector<64x64xf32>
    %78 = arith.addf %76, %77 : vector<64x64xf32>
    %c9 = arith.constant 9 : index
    %c0_39 = arith.constant 0 : index
    %79 = vector.load %arg3[%c9, %c0_39] : memref<16x128xf32, #tpu.memory_space<vmem>>, vector<1x64xf32>
    %80 = vector.broadcast %79 : vector<1x64xf32> to vector<64x64xf32>
    %81 = arith.addf %78, %80 : vector<64x64xf32>
    %cst_40 = arith.constant 0.000000e+00 : f32
    %82 = vector.broadcast %cst_40 : f32 to vector<64x64xf32>
    %83 = arith.maximumf %81, %82 : vector<64x64xf32>
    %84 = arith.truncf %83 : vector<64x64xf32> to vector<64x64xbf16>
    %c656 = arith.constant 656 : index
    %c0_41 = arith.constant 0 : index
    %85 = vector.load %arg2[%c656, %c0_41] : memref<720x192xbf16, #tpu.memory_space<vmem>>, vector<64x6xbf16>
    %cst_42 = arith.constant dense<0.000000e+00> : vector<64x6xf32>
    %86 = tpu.matmul %84, %85, %cst_42 {dimension_numbers = #tpu.dot_dimension_numbers<[1], [0], [0], [1], [0, 0, 1, 1], [], []>} : vector<64x64xbf16>, vector<64x6xbf16>, vector<64x6xf32> -> vector<64x6xf32>
    %c10 = arith.constant 10 : index
    %c0_43 = arith.constant 0 : index
    %87 = vector.load %arg3[%c10, %c0_43] : memref<16x128xf32, #tpu.memory_space<vmem>>, vector<1x6xf32>
    %88 = vector.broadcast %87 : vector<1x6xf32> to vector<64x6xf32>
    %89 = arith.addf %86, %88 : vector<64x6xf32>
    %90 = arith.negf %89 : vector<64x6xf32>
    %91 = math.exp %90 : vector<64x6xf32>
    %cst_44 = arith.constant 1.000000e+00 : f32
    %92 = vector.broadcast %cst_44 : f32 to vector<64x6xf32>
    %93 = arith.addf %92, %91 : vector<64x6xf32>
    %94 = arith.divf %92, %93 : vector<64x6xf32>
    %c0_45 = arith.constant 0 : index
    %c0_46 = arith.constant 0 : index
    %95 = vector.load %arg4[%c0_45, %c0_46] : memref<64x6xf32, #tpu.memory_space<vmem>>, vector<64x6xf32>
    tpu.vector_store %arg4[%c0_45, %c0_46], %94 {strides = array<i32>} : memref<64x6xf32, #tpu.memory_space<vmem>>, vector<64x6xf32>,
    return
  }
  func.func @transform_0(%arg0: i32) -> (i32, i32) {
    %c0_i32 = arith.constant 0 : i32
    %c0_i32_0 = arith.constant 0 : i32
    return %arg0, %c0_i32 : i32, i32
  }
  func.func @transform_1(%arg0: i32) -> (i32, i32) {
    %c0_i32 = arith.constant 0 : i32
    %c0_i32_0 = arith.constant 0 : i32
    %c0_i32_1 = arith.constant 0 : i32
    return %c0_i32, %c0_i32_0 : i32, i32
  }
  func.func @transform_2(%arg0: i32) -> (i32, i32) {
    %c0_i32 = arith.constant 0 : i32
    %c0_i32_0 = arith.constant 0 : i32
    %c0_i32_1 = arith.constant 0 : i32
    return %c0_i32, %c0_i32_0 : i32, i32
  }
  func.func @transform_3(%arg0: i32) -> (i32, i32) {
    %c0_i32 = arith.constant 0 : i32
    %c0_i32_0 = arith.constant 0 : i32
    return %arg0, %c0_i32 : i32, i32
  }
}

</mosaic_0001>

<llo_original>
// kernel: tpu_custom_call.1
$region0: #{tpu_custom_call.1}
  #allocation0 [shape = 'u32[]', space=smem, size = 0x4, offset = 0x4, fixed_abs, tag = 'smem constant byte address 0x4 - core index']
  #allocation1 [shape = 'u32[144,128]{1,0:T(1,128)}', space=vmem, size = 0x12000, scoped, tag = 'internal scratch']
  %s0 = inlined_call_operand.vmem [shape: f32[128,80], index: 0, kind: input, shape index: {}]
  %s1 = inlined_call_operand.vmem [shape: bf16[720,192], index: 1, kind: input, shape index: {}]
  %s2 = inlined_call_operand.vmem [shape: f32[16,128], index: 2, kind: input, shape index: {}]
  %s3 = inlined_call_operand.vmem [shape: f32[128,6], index: 3, kind: output, shape index: {}]
  %s4 = sld [smem:[#allocation0]]
  $region45: #{tpu_custom_call.1} parent=0
    _
  %s6 = ssub.s32 1, %s4
  %s7 = scalar_select 0, %s6, %s4
  loop: start=0, step=1, limit=4
  $region2: #{tpu_custom_call.1} parent=0 // loop_pre_header
    _
  $region3: #{tpu_custom_call.1} parent=0 // loop_header
    %s9 = sphi 0, %s13
    %p10 = scmp.ge.s32.totalorder %s9, 4
    %s19 = sphi 0, %s21
    %s22 = sphi 0, %s19
    %s23 = sphi 0, %s22
    %s39 = sphi 0, %s23
    %s43 = sphi 0, %s43
    %s45 = sphi 0, %s43
    %s46 = sphi 0, %s45
    %s60 = sphi 0, %s46
    %s64 = sphi 0, %s64
    %s66 = sphi 0, %s64
    %s67 = sphi 0, %s66
    %s81 = sphi 0, %s67
    %s87 = sphi 0, %s89
    %s90 = sphi 0, %s87
    %s91 = sphi 0, %s90
    %s107 = sphi 0, %s91
  $region4: #{tpu_custom_call.1} parent=0 // loop_header_branch
    %12 = sbr.rel (%p10) target = $region8
  $region5: #{tpu_custom_call.1} parent=0 // loop_body
    %s14 = ssub.s32 %s9, 1
    %s15 = ssub.s32 %s9, 2
    %s16 = sadd.s32 %s9, 1
    %s17 = ssub.s32 %s9, %s16
    %p18 = scmp.eq.s32.totalorder %s17, 0
    %s20 = sadd.s32 %s19, 1
    %s21 = scalar_select %p18, %s19, %s20
    %p24 = pneg %p18
    %p25 = scmp.eq.s32.totalorder %s9, 1
    %p26 = por %p24, %p25
    %p27 = scmp.ne.s32.totalorder %s19, %s22
    %p28 = scmp.eq.s32.totalorder %s9, 0
    %p29 = por %p27, %p28
    %p30 = scmp.ne.s32.totalorder %s19, %s22
    %p31 = scmp.eq.s32.totalorder %s14, 1
    %p32 = por %p30, %p31
    %p33 = scmp.ne.s32.totalorder %s22, %s23
    %p34 = scmp.eq.s32.totalorder %s14, 0
    %p35 = por %p33, %p34
    %p36 = scmp.ne.s32.totalorder %s22, %s23
    %p37 = scmp.eq.s32.totalorder %s15, 1
    %p38 = por %p36, %p37
    %p40 = scmp.ne.s32.totalorder %s23, %s39
    %p41 = scmp.eq.s32.totalorder %s15, 0
    %p42 = por %p40, %p41
    %s44 = sadd.s32 %s43, 1
    %p47 = scmp.eq.s32.totalorder %s9, 1
    %p48 = scmp.ne.s32.totalorder %s43, %s45
    %p49 = scmp.eq.s32.totalorder %s9, 0
    %p50 = por %p48, %p49
    %p51 = scmp.ne.s32.totalorder %s43, %s45
    %p52 = scmp.eq.s32.totalorder %s14, 1
    %p53 = por %p51, %p52
    %p54 = scmp.ne.s32.totalorder %s45, %s46
    %p55 = scmp.eq.s32.totalorder %s14, 0
    %p56 = por %p54, %p55
    %p57 = scmp.ne.s32.totalorder %s45, %s46
    %p58 = scmp.eq.s32.totalorder %s15, 1
    %p59 = por %p57, %p58
    %p61 = scmp.ne.s32.totalorder %s46, %s60
    %p62 = scmp.eq.s32.totalorder %s15, 0
    %p63 = por %p61, %p62
    %s65 = sadd.s32 %s64, 1
    %p68 = scmp.eq.s32.totalorder %s9, 1
    %p69 = scmp.ne.s32.totalorder %s64, %s66
    %p70 = scmp.eq.s32.totalorder %s9, 0
    %p71 = por %p69, %p70
    %p72 = scmp.ne.s32.totalorder %s64, %s66
    %p73 = scmp.eq.s32.totalorder %s14, 1
    %p74 = por %p72, %p73
    %p75 = scmp.ne.s32.totalorder %s66, %s67
    %p76 = scmp.eq.s32.totalorder %s14, 0
    %p77 = por %p75, %p76
    %p78 = scmp.ne.s32.totalorder %s66, %s67
    %p79 = scmp.eq.s32.totalorder %s15, 1
    %p80 = por %p78, %p79
    %p82 = scmp.ne.s32.totalorder %s67, %s81
    %p83 = scmp.eq.s32.totalorder %s15, 0
    %p84 = por %p82, %p83
    %s85 = ssub.s32 %s9, %s16
    %p86 = scmp.eq.s32.totalorder %s85, 0
    %s88 = sadd.s32 %s87, 1
    %s89 = scalar_select %p86, %s87, %s88
    %p92 = pneg %p86
    %p93 = scmp.eq.s32.totalorder %s9, 1
    %p94 = por %p92, %p93
    %p95 = scmp.ne.s32.totalorder %s87, %s90
    %p96 = scmp.eq.s32.totalorder %s9, 0
    %p97 = por %p95, %p96
    %p98 = scmp.ne.s32.totalorder %s87, %s90
    %p99 = scmp.eq.s32.totalorder %s14, 1
    %p100 = por %p98, %p99
    %p101 = scmp.ne.s32.totalorder %s90, %s91
    %p102 = scmp.eq.s32.totalorder %s14, 0
    %p103 = por %p101, %p102
    %p104 = scmp.ne.s32.totalorder %s90, %s91
    %p105 = scmp.eq.s32.totalorder %s15, 1
    %p106 = por %p104, %p105
    %p108 = scmp.ne.s32.totalorder %s91, %s107
    %p109 = scmp.eq.s32.totalorder %s15, 0
    %p110 = por %p108, %p109
    %p111 = scmp.le.s32.totalorder 1, %s9
    %p112 = scmp.lt.s32.totalorder %s9, 3
    %p113 = pnand %p111, %p112
    %p114 = pneg %p113
    // Predicated region
    $region9: #{tpu_custom_call.1} parent=5 // pred_check
      _
    $region10: #{tpu_custom_call.1} parent=5 // pred_check_branch
      %116 = sbr.rel (%p113) target = $region12
    $region11: #{tpu_custom_call.1} parent=5 // pred_region
      %s117 = ssub.s32 %s9, 1
      // Predicated region
      $region13: #{tpu_custom_call.1} parent=11 // pred_check
        %p118 = pneg %p56
      $region14: #{tpu_custom_call.1} parent=11 // pred_check_branch
        %120 = sbr.rel (%p118) target = $region16
      $region15: #{tpu_custom_call.1} parent=11 // pred_region
        _
      $region16: #{tpu_custom_call.1} parent=11 // pred_fallthru
        _
      // Predicated region
      $region17: #{tpu_custom_call.1} parent=11 // pred_check
        %p121 = pneg %p77
      $region18: #{tpu_custom_call.1} parent=11 // pred_check_branch
        %123 = sbr.rel (%p121) target = $region20
      $region19: #{tpu_custom_call.1} parent=11 // pred_region
        _
      $region20: #{tpu_custom_call.1} parent=11 // pred_fallthru
        _
    $region12: #{tpu_custom_call.1} parent=5 // pred_fallthru
      _
    %p124 = scmp.lt.s32.totalorder %s9, 2
    // Predicated region
    $region21: #{tpu_custom_call.1} parent=5 // pred_check
      %p125 = pneg %p124
    $region22: #{tpu_custom_call.1} parent=5 // pred_check_branch
      %127 = sbr.rel (%p125) target = $region24
    $region23: #{tpu_custom_call.1} parent=5 // pred_region
      // Predicated region
      $region25: #{tpu_custom_call.1} parent=23 // pred_check
        %p128 = pneg %p29
      $region26: #{tpu_custom_call.1} parent=23 // pred_check_branch
        %130 = sbr.rel (%p128) target = $region28
      $region27: #{tpu_custom_call.1} parent=23 // pred_region
        %s131 = smul.u32 8, %s9
        %p132 = scmp.lt.s32.totalorder %s131, 15
        %s133 = scalar_select %p132, %s131, 15
        %s134 = smul.addr %s133, 8
        %s135 = scalar_lea.vmem %s0, %s134
        %s136 = smul.u32 8, %s9
      $region28: #{tpu_custom_call.1} parent=23 // pred_fallthru
        _
    $region24: #{tpu_custom_call.1} parent=5 // pred_fallthru
      _
    %p137 = scmp.le.s32.totalorder 1, %s9
    %p138 = scmp.lt.s32.totalorder %s9, 3
    %p139 = pnand %p137, %p138
    %p140 = pneg %p139
    // Predicated region
    $region29: #{tpu_custom_call.1} parent=5 // pred_check
      _
    $region30: #{tpu_custom_call.1} parent=5 // pred_check_branch
      %142 = sbr.rel (%p139) target = $region32
    $region31: #{tpu_custom_call.1} parent=5 // pred_region
      %s143 = ssub.s32 %s9, 1
      %s144 = smul.u32 8, %s14
      %p145 = scmp.lt.s32.totalorder %s144, 15
      %s146 = scalar_select %p145, %s144, 15
      %s147 = smul.addr %s146, 8
      %s148 = scalar_lea.vmem %s0, %s147
      %p149 = pneg %p35
      %p150 = pneg %p32
      %p151 = pneg %p56
      %p152 = pneg %p53
      %p153 = pneg %p77
      %p154 = pneg %p74
      %p155 = pneg %p103
      %p156 = pneg %p100
      %s157 = smul.u32 8, %s14
      %p158 = scmp.lt.s32.totalorder %s157, 15
      %s159 = scalar_select %p158, %s157, 15
      %s160 = smul.addr %s159, 8
      %s161 = scalar_lea.vmem %s3, %s160
      %s162 = smul.u32 8, %s14
      %p163 = scmp.lt.s32.totalorder %s162, 15
      %s164 = scalar_select %p163, %s162, 15
      %s165 = smul.addr %s164, 8
      %s166 = scalar_lea.vmem %s0, %s165
      %s167 = smul.u32 8, %s14
      %s168 = smul.u32 8, %s14
      %p169 = scmp.lt.s32.totalorder %s168, 15
      %s170 = scalar_select %p169, %s168, 15
      %s171 = smul.addr %s170, 8
      %s172 = scalar_lea.vmem %s3, %s171
      %s173 = smul.u32 8, %s14
      %v175 = vld [vmem:[%s166] sm:$0xff]
      %v176 = vld [vmem:[%s166 + $0x8] sm:$0xff]
      %v177 = vld [vmem:[%s166 + $0x10] sm:$0xff]
      %v178 = vld [vmem:[%s166 + $0x18] sm:$0xff]
      %v179 = vld [vmem:[%s166 + $0x20] sm:$0xff]
      %v180 = vld [vmem:[%s166 + $0x28] sm:$0xff]
      %v181 = vld [vmem:[%s166 + $0x30] sm:$0xff]
      %v182 = vld [vmem:[%s166 + $0x38] sm:$0xff]
      %v183 = vpack.c.bf16 %v176, %v175
      %v184 = vpack.c.bf16 %v178, %v177
      %v185 = vpack.c.bf16 %v180, %v179
      %v186 = vpack.c.bf16 %v182, %v181
      %v187 = vld [vmem:[%s1] sm:$0xff]
      %v188 = vld [vmem:[%s1 + $0x8] sm:$0xff]
      %v189 = vld [vmem:[%s1 + $0x10] sm:$0xff]
      %v190 = vld [vmem:[%s1 + $0x18] sm:$0xff]
      %v191 = vld [vmem:[%s1 + $0x20] sm:$0xff]
      %v192 = vld [vmem:[%s1 + $0x28] sm:$0xff]
      %v193 = vld [vmem:[%s1 + $0x30] sm:$0xff]
      %v194 = vld [vmem:[%s1 + $0x38] sm:$0xff]
      %v195 = vld [vmem:[%s1 + $0x40] sm:$0xff]
      %v196 = vld [vmem:[%s1 + $0x48] sm:$0xff]
      %v207 = vunpack.c.l.b16 %v187
      %v208 = vunpack.c.h.b16 %v187
      %v209 = vunpack.c.l.b16 %v188
      %v210 = vunpack.c.h.b16 %v188
      %v211 = vunpack.c.l.b16 %v189
      %v212 = vunpack.c.h.b16 %v189
      %v213 = vunpack.c.l.b16 %v190
      %v214 = vunpack.c.h.b16 %v190
      %v215 = vunpack.c.l.b16 %v191
      %v216 = vunpack.c.h.b16 %v191
      %v217 = vunpack.c.l.b16 %v192
      %v218 = vunpack.c.h.b16 %v192
      %v219 = vunpack.c.l.b16 %v193
      %v220 = vunpack.c.h.b16 %v193
      %v221 = vunpack.c.l.b16 %v194
      %v222 = vunpack.c.h.b16 %v194
      %v223 = vunpack.c.l.b16 %v195
      %v224 = vunpack.c.h.b16 %v195
      %v225 = vunpack.c.l.b16 %v196
      %v226 = vunpack.c.h.b16 %v196
      %v227 = vpack.c.b16 %v209, %v207
      %v228 = vpack.c.b16 %v210, %v208
      %v229 = vpack.c.b16 %v213, %v211
      %v230 = vpack.c.b16 %v214, %v212
      %v231 = vpack.c.b16 %v217, %v215
      %v232 = vpack.c.b16 %v218, %v216
      %v233 = vpack.c.b16 %v221, %v219
      %v234 = vpack.c.b16 %v222, %v220
      %v235 = vpack.c.b16 %v225, %v223
      %v236 = vpack.c.b16 %v226, %v224
      %vm247 = vcmask 654336
      %v249 = vsel %vm247, %v183, 0
      %v252 = vsel %vm247, %v184, 0
      %v255 = vsel %vm247, %v185, 0
      %v258 = vsel %vm247, %v186, 0
      %260 = vmatprep.subr.bf16.mxu0 0
      %261 = vmatpush1.bf16.msra.mxu0 0
      %262 = vmatprep.subr.bf16.mxu0 0
      %263 = vmatpush1.bf16.msra.mxu0 0
      %264 = vmatprep.subr.bf16.mxu0 0
      %265 = vmatpush1.bf16.msra.mxu0 0
      %266 = vmatprep.subr.bf16.mxu0 %v236
      %267 = vmatpush1.bf16.msra.mxu0 %v235
      %268 = vmatprep.subr.bf16.mxu0 %v234
      %269 = vmatpush1.bf16.msra.mxu0 %v233
      %270 = vmatprep.subr.bf16.mxu0 %v232
      %271 = vmatpush1.bf16.msra.mxu0 %v231
      %272 = vmatprep.subr.bf16.mxu0 %v230
      %273 = vmatpush1.bf16.msra.mxu0 %v229
      %274 = vmatprep.subr.bf16.mxu0 %v228
      %275 = vmatpush1.bf16.msra.mxu0 %v227
      %276 = vmatprep.subr.bf16.mxu0 0
      %277 = vmatpush2.bf16.msra.mxu0 0
      %278 = vmatprep.subr.bf16.mxu0 0
      %279 = vmatpush2.bf16.msra.mxu0 0
      %280 = vmatprep.subr.bf16.mxu0 0
      %281 = vmatpush2.bf16.msra.mxu0 0
      %282 = vmatprep.subr.bf16.mxu0 0
      %283 = vmatpush2.bf16.msra.mxu0 0
      %284 = vmatprep.subr.bf16.mxu0 0
      %285 = vmatpush2.bf16.msra.mxu0 0
      %286 = vmatprep.subr.bf16.mxu0 0
      %287 = vmatpush2.bf16.msra.mxu0 0
      %288 = vmatprep.subr.bf16.mxu0 0
      %289 = vmatpush2.bf16.msra.mxu0 0
      %290 = vmatprep.subr.bf16.mxu0 0
      %291 = vmatpush2.bf16.msra.mxu0 0
      %292 = vmatprep.mubr.bf16.mxu0 0
      %293 = vmatmul.mubr.bf16.gmra.mxu0 %v249
      %v294 = vpop.f32.mrf.mxu0
      %v295 = vadd.f32 0.0, %v294
      %v296 = vpop.f32.mrf.mxu0
      %v297 = vadd.f32 0.0, %v296
      %v298 = vpop.f32.mrf.mxu0
      %v299 = vadd.f32 0.0, %v298
      %v300 = vpop.f32.mrf.mxu0
      %v301 = vadd.f32 0.0, %v300
      %302 = vmatprep.mubr.bf16.mxu0 0
      %303 = vmatmul.mubr.bf16.gmra.mxu0 %v252
      %v304 = vpop.f32.mrf.mxu0
      %v305 = vadd.f32 0.0, %v304
      %v306 = vpop.f32.mrf.mxu0
      %v307 = vadd.f32 0.0, %v306
      %v308 = vpop.f32.mrf.mxu0
      %v309 = vadd.f32 0.0, %v308
      %v310 = vpop.f32.mrf.mxu0
      %v311 = vadd.f32 0.0, %v310
      %312 = vmatprep.mubr.bf16.mxu0 0
      %313 = vmatmul.mubr.bf16.gmra.mxu0 %v255
      %v314 = vpop.f32.mrf.mxu0
      %v315 = vadd.f32 0.0, %v314
      %v316 = vpop.f32.mrf.mxu0
      %v317 = vadd.f32 0.0, %v316
      %v318 = vpop.f32.mrf.mxu0
      %v319 = vadd.f32 0.0, %v318
      %v320 = vpop.f32.mrf.mxu0
      %v321 = vadd.f32 0.0, %v320
      %322 = vmatprep.mubr.bf16.mxu0 0
      %323 = vmatmul.mubr.bf16.gmra.mxu0 %v258
      %v324 = vpop.f32.mrf.mxu0
      %v325 = vadd.f32 0.0, %v324
      %v326 = vpop.f32.mrf.mxu0
      %v327 = vadd.f32 0.0, %v326
      %v328 = vpop.f32.mrf.mxu0
      %v329 = vadd.f32 0.0, %v328
      %v330 = vpop.f32.mrf.mxu0
      %v331 = vadd.f32 0.0, %v330
      %332 = vdwg.mxu0
      %v333 = vld [vmem:[%s2] sm:$0x1]
      %v334 = vlaneseq
      %v335 = vshrl.u32 %v334, 7
      %v336 = vsub.s32 0, %v335
      %v337 = vrot.slane %v333, %v336
      %v338 = vadd.f32 %v295, %v337
      %v339 = vadd.f32 %v299, %v337
      %v340 = vadd.f32 %v305, %v337
      %v341 = vadd.f32 %v309, %v337
      %v342 = vadd.f32 %v315, %v337
      %v343 = vadd.f32 %v319, %v337
      %v344 = vadd.f32 %v325, %v337
      %v345 = vadd.f32 %v329, %v337
      %v346 = vmax.f32 %v338, 0.0
      %v347 = vmax.f32 %v339, 0.0
      %v348 = vmax.f32 %v340, 0.0
      %v349 = vmax.f32 %v341, 0.0
      %v350 = vmax.f32 %v342, 0.0
      %v351 = vmax.f32 %v343, 0.0
      %v352 = vmax.f32 %v344, 0.0
      %v353 = vmax.f32 %v345, 0.0
      %v354 = vpack.c.bf16 %v347, %v346
      %v355 = vpack.c.bf16 %v349, %v348
      %v356 = vpack.c.bf16 %v351, %v350
      %v357 = vpack.c.bf16 %v353, %v352
      %v358 = vld [vmem:[%s1 + $0x50] sm:$0xf]
      %v359 = vld [vmem:[%s1 + $0x58] sm:$0xf]
      %v360 = vld [vmem:[%s1 + $0x60] sm:$0xf]
      %v361 = vld [vmem:[%s1 + $0x68] sm:$0xf]
      %v362 = vld [vmem:[%s1 + $0x70] sm:$0xf]
      %v363 = vld [vmem:[%s1 + $0x78] sm:$0xf]
      %v364 = vld [vmem:[%s1 + $0x80] sm:$0xf]
      %v365 = vld [vmem:[%s1 + $0x88] sm:$0xf]
      %v366 = vld [vmem:[%s2 + $0x1] sm:$0x1]
      %v367 = vlaneseq
      %v368 = vshrl.u32 %v367, 7
      %v369 = vsub.s32 0, %v368
      %v370 = vrot.slane %v366, %v369
      %v379 = vunpack.c.l.b16 %v358
      %v380 = vunpack.c.l.b16 %v359
      %v381 = vunpack.c.l.b16 %v360
      %v382 = vunpack.c.l.b16 %v361
      %v383 = vunpack.c.l.b16 %v362
      %v384 = vunpack.c.l.b16 %v363
      %v385 = vunpack.c.l.b16 %v364
      %v386 = vunpack.c.l.b16 %v365
      %v387 = vpack.c.b16 %v380, %v379
      %v388 = vpack.c.b16 %v382, %v381
      %v389 = vpack.c.b16 %v384, %v383
      %v390 = vpack.c.b16 %v386, %v385
      %vm395 = vcmask 523264
      %v397 = vsel %vm395, %v354, 0
      %v400 = vsel %vm395, %v355, 0
      %v403 = vsel %vm395, %v356, 0
      %v406 = vsel %vm395, %v357, 0
      %408 = vmatprep.subr.bf16.mxu0 0
      %409 = vmatpush1.bf16.msra.mxu0 0
      %410 = vmatprep.subr.bf16.mxu0 0
      %411 = vmatpush1.bf16.msra.mxu0 0
      %412 = vmatprep.subr.bf16.mxu0 0
      %413 = vmatpush1.bf16.msra.mxu0 0
      %414 = vmatprep.subr.bf16.mxu0 0
      %415 = vmatpush1.bf16.msra.mxu0 0
      %416 = vmatprep.subr.bf16.mxu0 0
      %417 = vmatpush1.bf16.msra.mxu0 %v390
      %418 = vmatprep.subr.bf16.mxu0 0
      %419 = vmatpush1.bf16.msra.mxu0 %v389
      %420 = vmatprep.subr.bf16.mxu0 0
      %421 = vmatpush1.bf16.msra.mxu0 %v388
      %422 = vmatprep.subr.bf16.mxu0 0
      %423 = vmatpush1.bf16.msra.mxu0 %v387
      %424 = vmatprep.subr.bf16.mxu0 0
      %425 = vmatpush2.bf16.msra.mxu0 0
      %426 = vmatprep.subr.bf16.mxu0 0
      %427 = vmatpush2.bf16.msra.mxu0 0
      %428 = vmatprep.subr.bf16.mxu0 0
      %429 = vmatpush2.bf16.msra.mxu0 0
      %430 = vmatprep.subr.bf16.mxu0 0
      %431 = vmatpush2.bf16.msra.mxu0 0
      %432 = vmatprep.subr.bf16.mxu0 0
      %433 = vmatpush2.bf16.msra.mxu0 0
      %434 = vmatprep.subr.bf16.mxu0 0
      %435 = vmatpush2.bf16.msra.mxu0 0
      %436 = vmatprep.subr.bf16.mxu0 0
      %437 = vmatpush2.bf16.msra.mxu0 0
      %438 = vmatprep.subr.bf16.mxu0 0
      %439 = vmatpush2.bf16.msra.mxu0 0
      %440 = vmatprep.mubr.bf16.mxu0 0
      %441 = vmatmul.mubr.bf16.gmra.mxu0 %v397
      %v442 = vpop.f32.mrf.mxu0
      %v443 = vadd.f32 %v370, %v442
      %v444 = vpop.f32.mrf.mxu0
      %v445 = vpop.f32.mrf.mxu0
      %v446 = vadd.f32 %v370, %v445
      %v447 = vpop.f32.mrf.mxu0
      %448 = vmatprep.mubr.bf16.mxu0 0
      %449 = vmatmul.mubr.bf16.gmra.mxu0 %v400
      %v450 = vpop.f32.mrf.mxu0
      %v451 = vadd.f32 %v370, %v450
      %v452 = vpop.f32.mrf.mxu0
      %v453 = vpop.f32.mrf.mxu0
      %v454 = vadd.f32 %v370, %v453
      %v455 = vpop.f32.mrf.mxu0
      %456 = vmatprep.mubr.bf16.mxu0 0
      %457 = vmatmul.mubr.bf16.gmra.mxu0 %v403
      %v458 = vpop.f32.mrf.mxu0
      %v459 = vadd.f32 %v370, %v458
      %v460 = vpop.f32.mrf.mxu0
      %v461 = vpop.f32.mrf.mxu0
      %v462 = vadd.f32 %v370, %v461
      %v463 = vpop.f32.mrf.mxu0
      %464 = vmatprep.mubr.bf16.mxu0 0
      %465 = vmatmul.mubr.bf16.gmra.mxu0 %v406
      %v466 = vpop.f32.mrf.mxu0
      %v467 = vadd.f32 %v370, %v466
      %v468 = vpop.f32.mrf.mxu0
      %v469 = vpop.f32.mrf.mxu0
      %v470 = vadd.f32 %v370, %v469
      %v471 = vpop.f32.mrf.mxu0
      %472 = vdwg.mxu0
      %v473 = vmax.f32 %v443, 0.0
      %v474 = vmax.f32 %v446, 0.0
      %v475 = vmax.f32 %v451, 0.0
      %v476 = vmax.f32 %v454, 0.0
      %v477 = vmax.f32 %v459, 0.0
      %v478 = vmax.f32 %v462, 0.0
      %v479 = vmax.f32 %v467, 0.0
      %v480 = vmax.f32 %v470, 0.0
      %v481 = vpack.c.bf16 %v474, %v473
      %v482 = vpack.c.bf16 %v476, %v475
      %v483 = vpack.c.bf16 %v478, %v477
      %v484 = vpack.c.bf16 %v480, %v479
      %v485 = vld [vmem:[%s1 + $0x90] sm:$0xf]
      %v486 = vld [vmem:[%s1 + $0x98] sm:$0xf]
      %v487 = vld [vmem:[%s1 + $0xa0] sm:$0xf]
      %v488 = vld [vmem:[%s1 + $0xa8] sm:$0xf]
      %v489 = vld [vmem:[%s1 + $0xb0] sm:$0xf]
      %v490 = vld [vmem:[%s1 + $0xb8] sm:$0xf]
      %v491 = vld [vmem:[%s1 + $0xc0] sm:$0xf]
      %v492 = vld [vmem:[%s1 + $0xc8] sm:$0xf]
      %v493 = vld [vmem:[%s2 + $0x2] sm:$0x1]
      %v494 = vlaneseq
      %v495 = vshrl.u32 %v494, 7
      %v496 = vsub.s32 0, %v495
      %v497 = vrot.slane %v493, %v496
      %v506 = vunpack.c.l.b16 %v485
      %v507 = vunpack.c.l.b16 %v486
      %v508 = vunpack.c.l.b16 %v487
      %v509 = vunpack.c.l.b16 %v488
      %v510 = vunpack.c.l.b16 %v489
      %v511 = vunpack.c.l.b16 %v490
      %v512 = vunpack.c.l.b16 %v491
      %v513 = vunpack.c.l.b16 %v492
      %v514 = vpack.c.b16 %v507, %v506
      %v515 = vpack.c.b16 %v509, %v508
      %v516 = vpack.c.b16 %v511, %v510
      %v517 = vpack.c.b16 %v513, %v512
      %v523 = vsel %vm395, %v481, 0
      %v526 = vsel %vm395, %v482, 0
      %v529 = vsel %vm395, %v483, 0
      %v532 = vsel %vm395, %v484, 0
      %534 = vmatprep.subr.bf16.mxu0 0
      %535 = vmatpush1.bf16.msra.mxu0 0
      %536 = vmatprep.subr.bf16.mxu0 0
      %537 = vmatpush1.bf16.msra.mxu0 0
      %538 = vmatprep.subr.bf16.mxu0 0
      %539 = vmatpush1.bf16.msra.mxu0 0
      %540 = vmatprep.subr.bf16.mxu0 0
      %541 = vmatpush1.bf16.msra.mxu0 0
      %542 = vmatprep.subr.bf16.mxu0 0
      %543 = vmatpush1.bf16.msra.mxu0 %v517
      %544 = vmatprep.subr.bf16.mxu0 0
      %545 = vmatpush1.bf16.msra.mxu0 %v516
      %546 = vmatprep.subr.bf16.mxu0 0
      %547 = vmatpush1.bf16.msra.mxu0 %v515
      %548 = vmatprep.subr.bf16.mxu0 0
      %549 = vmatpush1.bf16.msra.mxu0 %v514
      %550 = vmatprep.subr.bf16.mxu0 0
      %551 = vmatpush2.bf16.msra.mxu0 0
      %552 = vmatprep.subr.bf16.mxu0 0
      %553 = vmatpush2.bf16.msra.mxu0 0
      %554 = vmatprep.subr.bf16.mxu0 0
      %555 = vmatpush2.bf16.msra.mxu0 0
      %556 = vmatprep.subr.bf16.mxu0 0
      %557 = vmatpush2.bf16.msra.mxu0 0
      %558 = vmatprep.subr.bf16.mxu0 0
      %559 = vmatpush2.bf16.msra.mxu0 0
      %560 = vmatprep.subr.bf16.mxu0 0
      %561 = vmatpush2.bf16.msra.mxu0 0
      %562 = vmatprep.subr.bf16.mxu0 0
      %563 = vmatpush2.bf16.msra.mxu0 0
      %564 = vmatprep.subr.bf16.mxu0 0
      %565 = vmatpush2.bf16.msra.mxu0 0
      %566 = vmatprep.mubr.bf16.mxu0 0
      %567 = vmatmul.mubr.bf16.gmra.mxu0 %v523
      %v568 = vpop.f32.mrf.mxu0
      %v569 = vadd.f32 %v497, %v568
      %v570 = vpop.f32.mrf.mxu0
      %v571 = vpop.f32.mrf.mxu0
      %v572 = vadd.f32 %v497, %v571
      %v573 = vpop.f32.mrf.mxu0
      %574 = vmatprep.mubr.bf16.mxu0 0
      %575 = vmatmul.mubr.bf16.gmra.mxu0 %v526
      %v576 = vpop.f32.mrf.mxu0
      %v577 = vadd.f32 %v497, %v576
      %v578 = vpop.f32.mrf.mxu0
      %v579 = vpop.f32.mrf.mxu0
      %v580 = vadd.f32 %v497, %v579
      %v581 = vpop.f32.mrf.mxu0
      %582 = vmatprep.mubr.bf16.mxu0 0
      %583 = vmatmul.mubr.bf16.gmra.mxu0 %v529
      %v584 = vpop.f32.mrf.mxu0
      %v585 = vadd.f32 %v497, %v584
      %v586 = vpop.f32.mrf.mxu0
      %v587 = vpop.f32.mrf.mxu0
      %v588 = vadd.f32 %v497, %v587
      %v589 = vpop.f32.mrf.mxu0
      %590 = vmatprep.mubr.bf16.mxu0 0
      %591 = vmatmul.mubr.bf16.gmra.mxu0 %v532
      %v592 = vpop.f32.mrf.mxu0
      %v593 = vadd.f32 %v497, %v592
      %v594 = vpop.f32.mrf.mxu0
      %v595 = vpop.f32.mrf.mxu0
      %v596 = vadd.f32 %v497, %v595
      %v597 = vpop.f32.mrf.mxu0
      %598 = vdwg.mxu0
      %v599 = vmax.f32 %v569, 0.0
      %v600 = vmax.f32 %v572, 0.0
      %v601 = vmax.f32 %v577, 0.0
      %v602 = vmax.f32 %v580, 0.0
      %v603 = vmax.f32 %v585, 0.0
      %v604 = vmax.f32 %v588, 0.0
      %v605 = vmax.f32 %v593, 0.0
      %v606 = vmax.f32 %v596, 0.0
      %v607 = vpack.c.bf16 %v600, %v599
      %v608 = vpack.c.bf16 %v602, %v601
      %v609 = vpack.c.bf16 %v604, %v603
      %v610 = vpack.c.bf16 %v606, %v605
      %v611 = vld [vmem:[%s1 + $0xd0] sm:$0xf]
      %v612 = vld [vmem:[%s1 + $0xd8] sm:$0xf]
      %v613 = vld [vmem:[%s1 + $0xe0] sm:$0xf]
      %v614 = vld [vmem:[%s1 + $0xe8] sm:$0xf]
      %v615 = vld [vmem:[%s1 + $0xf0] sm:$0xf]
      %v616 = vld [vmem:[%s1 + $0xf8] sm:$0xf]
      %v617 = vld [vmem:[%s1 + $0x100] sm:$0xf]
      %v618 = vld [vmem:[%s1 + $0x108] sm:$0xf]
      %v619 = vld [vmem:[%s2 + $0x3] sm:$0x1]
      %v620 = vlaneseq
      %v621 = vshrl.u32 %v620, 7
      %v622 = vsub.s32 0, %v621
      %v623 = vrot.slane %v619, %v622
      %v632 = vunpack.c.l.b16 %v611
      %v633 = vunpack.c.l.b16 %v612
      %v634 = vunpack.c.l.b16 %v613
      %v635 = vunpack.c.l.b16 %v614
      %v636 = vunpack.c.l.b16 %v615
      %v637 = vunpack.c.l.b16 %v616
      %v638 = vunpack.c.l.b16 %v617
      %v639 = vunpack.c.l.b16 %v618
      %v640 = vpack.c.b16 %v633, %v632
      %v641 = vpack.c.b16 %v635, %v634
      %v642 = vpack.c.b16 %v637, %v636
      %v643 = vpack.c.b16 %v639, %v638
      %v649 = vsel %vm395, %v607, 0
      %v652 = vsel %vm395, %v608, 0
      %v655 = vsel %vm395, %v609, 0
      %v658 = vsel %vm395, %v610, 0
      %660 = vmatprep.subr.bf16.mxu0 0
      %661 = vmatpush1.bf16.msra.mxu0 0
      %662 = vmatprep.subr.bf16.mxu0 0
      %663 = vmatpush1.bf16.msra.mxu0 0
      %664 = vmatprep.subr.bf16.mxu0 0
      %665 = vmatpush1.bf16.msra.mxu0 0
      %666 = vmatprep.subr.bf16.mxu0 0
      %667 = vmatpush1.bf16.msra.mxu0 0
      %668 = vmatprep.subr.bf16.mxu0 0
      %669 = vmatpush1.bf16.msra.mxu0 %v643
      %670 = vmatprep.subr.bf16.mxu0 0
      %671 = vmatpush1.bf16.msra.mxu0 %v642
      %672 = vmatprep.subr.bf16.mxu0 0
      %673 = vmatpush1.bf16.msra.mxu0 %v641
      %674 = vmatprep.subr.bf16.mxu0 0
      %675 = vmatpush1.bf16.msra.mxu0 %v640
      %676 = vmatprep.subr.bf16.mxu0 0
      %677 = vmatpush2.bf16.msra.mxu0 0
      %678 = vmatprep.subr.bf16.mxu0 0
      %679 = vmatpush2.bf16.msra.mxu0 0
      %680 = vmatprep.subr.bf16.mxu0 0
      %681 = vmatpush2.bf16.msra.mxu0 0
      %682 = vmatprep.subr.bf16.mxu0 0
      %683 = vmatpush2.bf16.msra.mxu0 0
      %684 = vmatprep.subr.bf16.mxu0 0
      %685 = vmatpush2.bf16.msra.mxu0 0
      %686 = vmatprep.subr.bf16.mxu0 0
      %687 = vmatpush2.bf16.msra.mxu0 0
      %688 = vmatprep.subr.bf16.mxu0 0
      %689 = vmatpush2.bf16.msra.mxu0 0
      %690 = vmatprep.subr.bf16.mxu0 0
      %691 = vmatpush2.bf16.msra.mxu0 0
      %692 = vmatprep.mubr.bf16.mxu0 0
      %693 = vmatmul.mubr.bf16.gmra.mxu0 %v649
      %v694 = vpop.f32.mrf.mxu0
      %v695 = vadd.f32 %v623, %v694
      %v696 = vpop.f32.mrf.mxu0
      %v697 = vpop.f32.mrf.mxu0
      %v698 = vadd.f32 %v623, %v697
      %v699 = vpop.f32.mrf.mxu0
      %700 = vmatprep.mubr.bf16.mxu0 0
      %701 = vmatmul.mubr.bf16.gmra.mxu0 %v652
      %v702 = vpop.f32.mrf.mxu0
      %v703 = vadd.f32 %v623, %v702
      %v704 = vpop.f32.mrf.mxu0
      %v705 = vpop.f32.mrf.mxu0
      %v706 = vadd.f32 %v623, %v705
      %v707 = vpop.f32.mrf.mxu0
      %708 = vmatprep.mubr.bf16.mxu0 0
      %709 = vmatmul.mubr.bf16.gmra.mxu0 %v655
      %v710 = vpop.f32.mrf.mxu0
      %v711 = vadd.f32 %v623, %v710
      %v712 = vpop.f32.mrf.mxu0
      %v713 = vpop.f32.mrf.mxu0
      %v714 = vadd.f32 %v623, %v713
      %v715 = vpop.f32.mrf.mxu0
      %716 = vmatprep.mubr.bf16.mxu0 0
      %717 = vmatmul.mubr.bf16.gmra.mxu0 %v658
      %v718 = vpop.f32.mrf.mxu0
      %v719 = vadd.f32 %v623, %v718
      %v720 = vpop.f32.mrf.mxu0
      %v721 = vpop.f32.mrf.mxu0
      %v722 = vadd.f32 %v623, %v721
      %v723 = vpop.f32.mrf.mxu0
      %724 = vdwg.mxu0
      %v725 = vmax.f32 %v695, 0.0
      %v726 = vmax.f32 %v698, 0.0
      %v727 = vmax.f32 %v703, 0.0
      %v728 = vmax.f32 %v706, 0.0
      %v729 = vmax.f32 %v711, 0.0
      %v730 = vmax.f32 %v714, 0.0
      %v731 = vmax.f32 %v719, 0.0
      %v732 = vmax.f32 %v722, 0.0
      %v733 = vpack.c.bf16 %v726, %v725
      %v734 = vpack.c.bf16 %v728, %v727
      %v735 = vpack.c.bf16 %v730, %v729
      %v736 = vpack.c.bf16 %v732, %v731
      %v737 = vld [vmem:[%s1 + $0x110] sm:$0xf]
      %v738 = vld [vmem:[%s1 + $0x118] sm:$0xf]
      %v739 = vld [vmem:[%s1 + $0x120] sm:$0xf]
      %v740 = vld [vmem:[%s1 + $0x128] sm:$0xf]
      %v741 = vld [vmem:[%s1 + $0x130] sm:$0xf]
      %v742 = vld [vmem:[%s1 + $0x138] sm:$0xf]
      %v743 = vld [vmem:[%s1 + $0x140] sm:$0xf]
      %v744 = vld [vmem:[%s1 + $0x148] sm:$0xf]
      %v753 = vunpack.c.l.b16 %v737
      %v754 = vunpack.c.l.b16 %v738
      %v755 = vunpack.c.l.b16 %v739
      %v756 = vunpack.c.l.b16 %v740
      %v757 = vunpack.c.l.b16 %v741
      %v758 = vunpack.c.l.b16 %v742
      %v759 = vunpack.c.l.b16 %v743
      %v760 = vunpack.c.l.b16 %v744
      %v761 = vpack.c.b16 %v754, %v753
      %v762 = vpack.c.b16 %v756, %v755
      %v763 = vpack.c.b16 %v758, %v757
      %v764 = vpack.c.b16 %v760, %v759
      %777 = vrot.lane.b32.xlu0 %v295, 64
      %v778 = vpop.permute.xlu0 %777
      %779 = vrot.lane.b32.xlu0 %v299, 64
      %v780 = vpop.permute.xlu0 %779
      %781 = vrot.lane.b32.xlu0 %v305, 64
      %v782 = vpop.permute.xlu0 %781
      %783 = vrot.lane.b32.xlu0 %v309, 64
      %v784 = vpop.permute.xlu0 %783
      %785 = vrot.lane.b32.xlu0 %v315, 64
      %v786 = vpop.permute.xlu0 %785
      %787 = vrot.lane.b32.xlu0 %v319, 64
      %v788 = vpop.permute.xlu0 %787
      %789 = vrot.lane.b32.xlu0 %v325, 64
      %v790 = vpop.permute.xlu0 %789
      %791 = vrot.lane.b32.xlu0 %v329, 64
      %v792 = vpop.permute.xlu0 %791
      %v802 = vsel %vm395, %v733, 0
      %v805 = vsel %vm395, %v734, 0
      %v808 = vsel %vm395, %v735, 0
      %v811 = vsel %vm395, %v736, 0
      %813 = vmatprep.subr.bf16.mxu0 0
      %814 = vmatpush1.bf16.msra.mxu0 0
      %815 = vmatprep.subr.bf16.mxu0 0
      %816 = vmatpush1.bf16.msra.mxu0 0
      %817 = vmatprep.subr.bf16.mxu0 0
      %818 = vmatpush1.bf16.msra.mxu0 0
      %819 = vmatprep.subr.bf16.mxu0 0
      %820 = vmatpush1.bf16.msra.mxu0 0
      %821 = vmatprep.subr.bf16.mxu0 0
      %822 = vmatpush1.bf16.msra.mxu0 %v764
      %823 = vmatprep.subr.bf16.mxu0 0
      %824 = vmatpush1.bf16.msra.mxu0 %v763
      %825 = vmatprep.subr.bf16.mxu0 0
      %826 = vmatpush1.bf16.msra.mxu0 %v762
      %827 = vmatprep.subr.bf16.mxu0 0
      %828 = vmatpush1.bf16.msra.mxu0 %v761
      %829 = vmatprep.subr.bf16.mxu0 0
      %830 = vmatpush2.bf16.msra.mxu0 0
      %831 = vmatprep.subr.bf16.mxu0 0
      %832 = vmatpush2.bf16.msra.mxu0 0
      %833 = vmatprep.subr.bf16.mxu0 0
      %834 = vmatpush2.bf16.msra.mxu0 0
      %835 = vmatprep.subr.bf16.mxu0 0
      %836 = vmatpush2.bf16.msra.mxu0 0
      %837 = vmatprep.subr.bf16.mxu0 0
      %838 = vmatpush2.bf16.msra.mxu0 0
      %839 = vmatprep.subr.bf16.mxu0 0
      %840 = vmatpush2.bf16.msra.mxu0 0
      %841 = vmatprep.subr.bf16.mxu0 0
      %842 = vmatpush2.bf16.msra.mxu0 0
      %843 = vmatprep.subr.bf16.mxu0 0
      %844 = vmatpush2.bf16.msra.mxu0 0
      %845 = vmatprep.mubr.bf16.mxu0 0
      %846 = vmatmul.mubr.bf16.gmra.mxu0 %v802
      %v847 = vpop.f32.mrf.mxu0
      %v848 = vadd.f32 %v778, %v847
      %v849 = vpop.f32.mrf.mxu0
      %v850 = vpop.f32.mrf.mxu0
      %v851 = vadd.f32 %v780, %v850
      %v852 = vpop.f32.mrf.mxu0
      %853 = vmatprep.mubr.bf16.mxu0 0
      %854 = vmatmul.mubr.bf16.gmra.mxu0 %v805
      %v855 = vpop.f32.mrf.mxu0
      %v856 = vadd.f32 %v782, %v855
      %v857 = vpop.f32.mrf.mxu0
      %v858 = vpop.f32.mrf.mxu0
      %v859 = vadd.f32 %v784, %v858
      %v860 = vpop.f32.mrf.mxu0
      %861 = vmatprep.mubr.bf16.mxu0 0
      %862 = vmatmul.mubr.bf16.gmra.mxu0 %v808
      %v863 = vpop.f32.mrf.mxu0
      %v864 = vadd.f32 %v786, %v863
      %v865 = vpop.f32.mrf.mxu0
      %v866 = vpop.f32.mrf.mxu0
      %v867 = vadd.f32 %v788, %v866
      %v868 = vpop.f32.mrf.mxu0
      %869 = vmatprep.mubr.bf16.mxu0 0
      %870 = vmatmul.mubr.bf16.gmra.mxu0 %v811
      %v871 = vpop.f32.mrf.mxu0
      %v872 = vadd.f32 %v790, %v871
      %v873 = vpop.f32.mrf.mxu0
      %v874 = vpop.f32.mrf.mxu0
      %v875 = vadd.f32 %v792, %v874
      %v876 = vpop.f32.mrf.mxu0
      %877 = vdwg.mxu0
      %v878 = vld [vmem:[%s2 + $0x4] sm:$0x1]
      %v879 = vlaneseq
      %v880 = vshrl.u32 %v879, 7
      %v881 = vsub.s32 0, %v880
      %v882 = vrot.slane %v878, %v881
      %v883 = vadd.f32 %v848, %v882
      %v884 = vadd.f32 %v851, %v882
      %v885 = vadd.f32 %v856, %v882
      %v886 = vadd.f32 %v859, %v882
      %v887 = vadd.f32 %v864, %v882
      %v888 = vadd.f32 %v867, %v882
      %v889 = vadd.f32 %v872, %v882
      %v890 = vadd.f32 %v875, %v882
      %v891 = vmax.f32 %v883, 0.0
      %v892 = vmax.f32 %v884, 0.0
      %v893 = vmax.f32 %v885, 0.0
      %v894 = vmax.f32 %v886, 0.0
      %v895 = vmax.f32 %v887, 0.0
      %v896 = vmax.f32 %v888, 0.0
      %v897 = vmax.f32 %v889, 0.0
      %v898 = vmax.f32 %v890, 0.0
      %v899 = vpack.c.bf16 %v892, %v891
      %v900 = vpack.c.bf16 %v894, %v893
      %v901 = vpack.c.bf16 %v896, %v895
      %v902 = vpack.c.bf16 %v898, %v897
      %v903 = vld [vmem:[%s1 + $0x150] sm:$0xf]
      %v904 = vld [vmem:[%s1 + $0x158] sm:$0xf]
      %v905 = vld [vmem:[%s1 + $0x160] sm:$0xf]
      %v906 = vld [vmem:[%s1 + $0x168] sm:$0xf]
      %v907 = vld [vmem:[%s1 + $0x170] sm:$0xf]
      %v908 = vld [vmem:[%s1 + $0x178] sm:$0xf]
      %v909 = vld [vmem:[%s1 + $0x180] sm:$0xf]
      %v910 = vld [vmem:[%s1 + $0x188] sm:$0xf]
      %v911 = vld [vmem:[%s2 + $0x5] sm:$0x1]
      %v912 = vlaneseq
      %v913 = vshrl.u32 %v912, 7
      %v914 = vsub.s32 0, %v913
      %v915 = vrot.slane %v911, %v914
      %v924 = vunpack.c.l.b16 %v903
      %v925 = vunpack.c.l.b16 %v904
      %v926 = vunpack.c.l.b16 %v905
      %v927 = vunpack.c.l.b16 %v906
      %v928 = vunpack.c.l.b16 %v907
      %v929 = vunpack.c.l.b16 %v908
      %v930 = vunpack.c.l.b16 %v909
      %v931 = vunpack.c.l.b16 %v910
      %v932 = vpack.c.b16 %v925, %v924
      %v933 = vpack.c.b16 %v927, %v926
      %v934 = vpack.c.b16 %v929, %v928
      %v935 = vpack.c.b16 %v931, %v930
      %v941 = vsel %vm395, %v899, 0
      %v944 = vsel %vm395, %v900, 0
      %v947 = vsel %vm395, %v901, 0
      %v950 = vsel %vm395, %v902, 0
      %952 = vmatprep.subr.bf16.mxu0 0
      %953 = vmatpush1.bf16.msra.mxu0 0
      %954 = vmatprep.subr.bf16.mxu0 0
      %955 = vmatpush1.bf16.msra.mxu0 0
      %956 = vmatprep.subr.bf16.mxu0 0
      %957 = vmatpush1.bf16.msra.mxu0 0
      %958 = vmatprep.subr.bf16.mxu0 0
      %959 = vmatpush1.bf16.msra.mxu0 0
      %960 = vmatprep.subr.bf16.mxu0 0
      %961 = vmatpush1.bf16.msra.mxu0 %v935
      %962 = vmatprep.subr.bf16.mxu0 0
      %963 = vmatpush1.bf16.msra.mxu0 %v934
      %964 = vmatprep.subr.bf16.mxu0 0
      %965 = vmatpush1.bf16.msra.mxu0 %v933
      %966 = vmatprep.subr.bf16.mxu0 0
      %967 = vmatpush1.bf16.msra.mxu0 %v932
      %968 = vmatprep.subr.bf16.mxu0 0
      %969 = vmatpush2.bf16.msra.mxu0 0
      %970 = vmatprep.subr.bf16.mxu0 0
      %971 = vmatpush2.bf16.msra.mxu0 0
      %972 = vmatprep.subr.bf16.mxu0 0
      %973 = vmatpush2.bf16.msra.mxu0 0
      %974 = vmatprep.subr.bf16.mxu0 0
      %975 = vmatpush2.bf16.msra.mxu0 0
      %976 = vmatprep.subr.bf16.mxu0 0
      %977 = vmatpush2.bf16.msra.mxu0 0
      %978 = vmatprep.subr.bf16.mxu0 0
      %979 = vmatpush2.bf16.msra.mxu0 0
      %980 = vmatprep.subr.bf16.mxu0 0
      %981 = vmatpush2.bf16.msra.mxu0 0
      %982 = vmatprep.subr.bf16.mxu0 0
      %983 = vmatpush2.bf16.msra.mxu0 0
      %984 = vmatprep.mubr.bf16.mxu0 0
      %985 = vmatmul.mubr.bf16.gmra.mxu0 %v941
      %v986 = vpop.f32.mrf.mxu0
      %v987 = vadd.f32 %v915, %v986
      %v988 = vpop.f32.mrf.mxu0
      %v989 = vpop.f32.mrf.mxu0
      %v990 = vadd.f32 %v915, %v989
      %v991 = vpop.f32.mrf.mxu0
      %992 = vmatprep.mubr.bf16.mxu0 0
      %993 = vmatmul.mubr.bf16.gmra.mxu0 %v944
      %v994 = vpop.f32.mrf.mxu0
      %v995 = vadd.f32 %v915, %v994
      %v996 = vpop.f32.mrf.mxu0
      %v997 = vpop.f32.mrf.mxu0
      %v998 = vadd.f32 %v915, %v997
      %v999 = vpop.f32.mrf.mxu0
      %1000 = vmatprep.mubr.bf16.mxu0 0
      %1001 = vmatmul.mubr.bf16.gmra.mxu0 %v947
      %v1002 = vpop.f32.mrf.mxu0
      %v1003 = vadd.f32 %v915, %v1002
      %v1004 = vpop.f32.mrf.mxu0
      %v1005 = vpop.f32.mrf.mxu0
      %v1006 = vadd.f32 %v915, %v1005
      %v1007 = vpop.f32.mrf.mxu0
      %1008 = vmatprep.mubr.bf16.mxu0 0
      %1009 = vmatmul.mubr.bf16.gmra.mxu0 %v950
      %v1010 = vpop.f32.mrf.mxu0
      %v1011 = vadd.f32 %v915, %v1010
      %v1012 = vpop.f32.mrf.mxu0
      %v1013 = vpop.f32.mrf.mxu0
      %v1014 = vadd.f32 %v915, %v1013
      %v1015 = vpop.f32.mrf.mxu0
      %1016 = vdwg.mxu0
      %v1017 = vmax.f32 %v987, 0.0
      %v1018 = vmax.f32 %v990, 0.0
      %v1019 = vmax.f32 %v995, 0.0
      %v1020 = vmax.f32 %v998, 0.0
      %v1021 = vmax.f32 %v1003, 0.0
      %v1022 = vmax.f32 %v1006, 0.0
      %v1023 = vmax.f32 %v1011, 0.0
      %v1024 = vmax.f32 %v1014, 0.0
      %v1025 = vpack.c.bf16 %v1018, %v1017
      %v1026 = vpack.c.bf16 %v1020, %v1019
      %v1027 = vpack.c.bf16 %v1022, %v1021
      %v1028 = vpack.c.bf16 %v1024, %v1023
      %v1029 = vld [vmem:[%s1 + $0x190] sm:$0xf]
      %v1030 = vld [vmem:[%s1 + $0x198] sm:$0xf]
      %v1031 = vld [vmem:[%s1 + $0x1a0] sm:$0xf]
      %v1032 = vld [vmem:[%s1 + $0x1a8] sm:$0xf]
      %v1033 = vld [vmem:[%s1 + $0x1b0] sm:$0xf]
      %v1034 = vld [vmem:[%s1 + $0x1b8] sm:$0xf]
      %v1035 = vld [vmem:[%s1 + $0x1c0] sm:$0xf]
      %v1036 = vld [vmem:[%s1 + $0x1c8] sm:$0xf]
      %v1037 = vld [vmem:[%s2 + $0x6] sm:$0x1]
      %v1038 = vlaneseq
      %v1039 = vshrl.u32 %v1038, 7
      %v1040 = vsub.s32 0, %v1039
      %v1041 = vrot.slane %v1037, %v1040
      %v1050 = vunpack.c.l.b16 %v1029
      %v1051 = vunpack.c.l.b16 %v1030
      %v1052 = vunpack.c.l.b16 %v1031
      %v1053 = vunpack.c.l.b16 %v1032
      %v1054 = vunpack.c.l.b16 %v1033
      %v1055 = vunpack.c.l.b16 %v1034
      %v1056 = vunpack.c.l.b16 %v1035
      %v1057 = vunpack.c.l.b16 %v1036
      %v1058 = vpack.c.b16 %v1051, %v1050
      %v1059 = vpack.c.b16 %v1053, %v1052
      %v1060 = vpack.c.b16 %v1055, %v1054
      %v1061 = vpack.c.b16 %v1057, %v1056
      %v1067 = vsel %vm395, %v1025, 0
      %v1070 = vsel %vm395, %v1026, 0
      %v1073 = vsel %vm395, %v1027, 0
      %v1076 = vsel %vm395, %v1028, 0
      %1078 = vmatprep.subr.bf16.mxu0 0
      %1079 = vmatpush1.bf16.msra.mxu0 0
      %1080 = vmatprep.subr.bf16.mxu0 0
      %1081 = vmatpush1.bf16.msra.mxu0 0
      %1082 = vmatprep.subr.bf16.mxu0 0
      %1083 = vmatpush1.bf16.msra.mxu0 0
      %1084 = vmatprep.subr.bf16.mxu0 0
      %1085 = vmatpush1.bf16.msra.mxu0 0
      %1086 = vmatprep.subr.bf16.mxu0 0
      %1087 = vmatpush1.bf16.msra.mxu0 %v1061
      %1088 = vmatprep.subr.bf16.mxu0 0
      %1089 = vmatpush1.bf16.msra.mxu0 %v1060
      %1090 = vmatprep.subr.bf16.mxu0 0
      %1091 = vmatpush1.bf16.msra.mxu0 %v1059
      %1092 = vmatprep.subr.bf16.mxu0 0
      %1093 = vmatpush1.bf16.msra.mxu0 %v1058
      %1094 = vmatprep.subr.bf16.mxu0 0
      %1095 = vmatpush2.bf16.msra.mxu0 0
      %1096 = vmatprep.subr.bf16.mxu0 0
      %1097 = vmatpush2.bf16.msra.mxu0 0
      %1098 = vmatprep.subr.bf16.mxu0 0
      %1099 = vmatpush2.bf16.msra.mxu0 0
      %1100 = vmatprep.subr.bf16.mxu0 0
      %1101 = vmatpush2.bf16.msra.mxu0 0
      %1102 = vmatprep.subr.bf16.mxu0 0
      %1103 = vmatpush2.bf16.msra.mxu0 0
      %1104 = vmatprep.subr.bf16.mxu0 0
      %1105 = vmatpush2.bf16.msra.mxu0 0
      %1106 = vmatprep.subr.bf16.mxu0 0
      %1107 = vmatpush2.bf16.msra.mxu0 0
      %1108 = vmatprep.subr.bf16.mxu0 0
      %1109 = vmatpush2.bf16.msra.mxu0 0
      %1110 = vmatprep.mubr.bf16.mxu0 0
      %1111 = vmatmul.mubr.bf16.gmra.mxu0 %v1067
      %v1112 = vpop.f32.mrf.mxu0
      %v1113 = vadd.f32 %v1041, %v1112
      %v1114 = vpop.f32.mrf.mxu0
      %v1115 = vpop.f32.mrf.mxu0
      %v1116 = vadd.f32 %v1041, %v1115
      %v1117 = vpop.f32.mrf.mxu0
      %1118 = vmatprep.mubr.bf16.mxu0 0
      %1119 = vmatmul.mubr.bf16.gmra.mxu0 %v1070
      %v1120 = vpop.f32.mrf.mxu0
      %v1121 = vadd.f32 %v1041, %v1120
      %v1122 = vpop.f32.mrf.mxu0
      %v1123 = vpop.f32.mrf.mxu0
      %v1124 = vadd.f32 %v1041, %v1123
      %v1125 = vpop.f32.mrf.mxu0
      %1126 = vmatprep.mubr.bf16.mxu0 0
      %1127 = vmatmul.mubr.bf16.gmra.mxu0 %v1073
      %v1128 = vpop.f32.mrf.mxu0
      %v1129 = vadd.f32 %v1041, %v1128
      %v1130 = vpop.f32.mrf.mxu0
      %v1131 = vpop.f32.mrf.mxu0
      %v1132 = vadd.f32 %v1041, %v1131
      %v1133 = vpop.f32.mrf.mxu0
      %1134 = vmatprep.mubr.bf16.mxu0 0
      %1135 = vmatmul.mubr.bf16.gmra.mxu0 %v1076
      %v1136 = vpop.f32.mrf.mxu0
      %v1137 = vadd.f32 %v1041, %v1136
      %v1138 = vpop.f32.mrf.mxu0
      %v1139 = vpop.f32.mrf.mxu0
      %v1140 = vadd.f32 %v1041, %v1139
      %v1141 = vpop.f32.mrf.mxu0
      %1142 = vdwg.mxu0
      %v1143 = vmax.f32 %v1113, 0.0
      %v1144 = vmax.f32 %v1116, 0.0
      %v1145 = vmax.f32 %v1121, 0.0
      %v1146 = vmax.f32 %v1124, 0.0
      %v1147 = vmax.f32 %v1129, 0.0
      %v1148 = vmax.f32 %v1132, 0.0
      %v1149 = vmax.f32 %v1137, 0.0
      %v1150 = vmax.f32 %v1140, 0.0
      %v1151 = vpack.c.bf16 %v1144, %v1143
      %v1152 = vpack.c.bf16 %v1146, %v1145
      %v1153 = vpack.c.bf16 %v1148, %v1147
      %v1154 = vpack.c.bf16 %v1150, %v1149
      %v1155 = vld [vmem:[%s1 + $0x1d0] sm:$0xf]
      %v1156 = vld [vmem:[%s1 + $0x1d8] sm:$0xf]
      %v1157 = vld [vmem:[%s1 + $0x1e0] sm:$0xf]
      %v1158 = vld [vmem:[%s1 + $0x1e8] sm:$0xf]
      %v1159 = vld [vmem:[%s1 + $0x1f0] sm:$0xf]
      %v1160 = vld [vmem:[%s1 + $0x1f8] sm:$0xf]
      %v1161 = vld [vmem:[%s1 + $0x200] sm:$0xf]
      %v1162 = vld [vmem:[%s1 + $0x208] sm:$0xf]
      %v1163 = vld [vmem:[%s2 + $0x7] sm:$0x1]
      %v1164 = vlaneseq
      %v1165 = vshrl.u32 %v1164, 7
      %v1166 = vsub.s32 0, %v1165
      %v1167 = vrot.slane %v1163, %v1166
      %v1176 = vunpack.c.l.b16 %v1155
      %v1177 = vunpack.c.l.b16 %v1156
      %v1178 = vunpack.c.l.b16 %v1157
      %v1179 = vunpack.c.l.b16 %v1158
      %v1180 = vunpack.c.l.b16 %v1159
      %v1181 = vunpack.c.l.b16 %v1160
      %v1182 = vunpack.c.l.b16 %v1161
      %v1183 = vunpack.c.l.b16 %v1162
      %v1184 = vpack.c.b16 %v1177, %v1176
      %v1185 = vpack.c.b16 %v1179, %v1178
      %v1186 = vpack.c.b16 %v1181, %v1180
      %v1187 = vpack.c.b16 %v1183, %v1182
      %v1193 = vsel %vm395, %v1151, 0
      %v1196 = vsel %vm395, %v1152, 0
      %v1199 = vsel %vm395, %v1153, 0
      %v1202 = vsel %vm395, %v1154, 0
      %1204 = vmatprep.subr.bf16.mxu0 0
      %1205 = vmatpush1.bf16.msra.mxu0 0
      %1206 = vmatprep.subr.bf16.mxu0 0
      %1207 = vmatpush1.bf16.msra.mxu0 0
      %1208 = vmatprep.subr.bf16.mxu0 0
      %1209 = vmatpush1.bf16.msra.mxu0 0
      %1210 = vmatprep.subr.bf16.mxu0 0
      %1211 = vmatpush1.bf16.msra.mxu0 0
      %1212 = vmatprep.subr.bf16.mxu0 0
      %1213 = vmatpush1.bf16.msra.mxu0 %v1187
      %1214 = vmatprep.subr.bf16.mxu0 0
      %1215 = vmatpush1.bf16.msra.mxu0 %v1186
      %1216 = vmatprep.subr.bf16.mxu0 0
      %1217 = vmatpush1.bf16.msra.mxu0 %v1185
      %1218 = vmatprep.subr.bf16.mxu0 0
      %1219 = vmatpush1.bf16.msra.mxu0 %v1184
      %1220 = vmatprep.subr.bf16.mxu0 0
      %1221 = vmatpush2.bf16.msra.mxu0 0
      %1222 = vmatprep.subr.bf16.mxu0 0
      %1223 = vmatpush2.bf16.msra.mxu0 0
      %1224 = vmatprep.subr.bf16.mxu0 0
      %1225 = vmatpush2.bf16.msra.mxu0 0
      %1226 = vmatprep.subr.bf16.mxu0 0
      %1227 = vmatpush2.bf16.msra.mxu0 0
      %1228 = vmatprep.subr.bf16.mxu0 0
      %1229 = vmatpush2.bf16.msra.mxu0 0
      %1230 = vmatprep.subr.bf16.mxu0 0
      %1231 = vmatpush2.bf16.msra.mxu0 0
      %1232 = vmatprep.subr.bf16.mxu0 0
      %1233 = vmatpush2.bf16.msra.mxu0 0
      %1234 = vmatprep.subr.bf16.mxu0 0
      %1235 = vmatpush2.bf16.msra.mxu0 0
      %1236 = vmatprep.mubr.bf16.mxu0 0
      %1237 = vmatmul.mubr.bf16.gmra.mxu0 %v1193
      %v1238 = vpop.f32.mrf.mxu0
      %v1239 = vadd.f32 %v1167, %v1238
      %v1240 = vpop.f32.mrf.mxu0
      %v1241 = vpop.f32.mrf.mxu0
      %v1242 = vadd.f32 %v1167, %v1241
      %v1243 = vpop.f32.mrf.mxu0
      %1244 = vmatprep.mubr.bf16.mxu0 0
      %1245 = vmatmul.mubr.bf16.gmra.mxu0 %v1196
      %v1246 = vpop.f32.mrf.mxu0
      %v1247 = vadd.f32 %v1167, %v1246
      %v1248 = vpop.f32.mrf.mxu0
      %v1249 = vpop.f32.mrf.mxu0
      %v1250 = vadd.f32 %v1167, %v1249
      %v1251 = vpop.f32.mrf.mxu0
      %1252 = vmatprep.mubr.bf16.mxu0 0
      %1253 = vmatmul.mubr.bf16.gmra.mxu0 %v1199
      %v1254 = vpop.f32.mrf.mxu0
      %v1255 = vadd.f32 %v1167, %v1254
      %v1256 = vpop.f32.mrf.mxu0
      %v1257 = vpop.f32.mrf.mxu0
      %v1258 = vadd.f32 %v1167, %v1257
      %v1259 = vpop.f32.mrf.mxu0
      %1260 = vmatprep.mubr.bf16.mxu0 0
      %1261 = vmatmul.mubr.bf16.gmra.mxu0 %v1202
      %v1262 = vpop.f32.mrf.mxu0
      %v1263 = vadd.f32 %v1167, %v1262
      %v1264 = vpop.f32.mrf.mxu0
      %v1265 = vpop.f32.mrf.mxu0
      %v1266 = vadd.f32 %v1167, %v1265
      %v1267 = vpop.f32.mrf.mxu0
      %1268 = vdwg.mxu0
      %v1269 = vmax.f32 %v1239, 0.0
      %v1270 = vmax.f32 %v1242, 0.0
      %v1271 = vmax.f32 %v1247, 0.0
      %v1272 = vmax.f32 %v1250, 0.0
      %v1273 = vmax.f32 %v1255, 0.0
      %v1274 = vmax.f32 %v1258, 0.0
      %v1275 = vmax.f32 %v1263, 0.0
      %v1276 = vmax.f32 %v1266, 0.0
      %v1277 = vpack.c.bf16 %v1270, %v1269
      %v1278 = vpack.c.bf16 %v1272, %v1271
      %v1279 = vpack.c.bf16 %v1274, %v1273
      %v1280 = vpack.c.bf16 %v1276, %v1275
      %v1281 = vld [vmem:[%s1 + $0x210] sm:$0xf]
      %v1282 = vld [vmem:[%s1 + $0x218] sm:$0xf]
      %v1283 = vld [vmem:[%s1 + $0x220] sm:$0xf]
      %v1284 = vld [vmem:[%s1 + $0x228] sm:$0xf]
      %v1285 = vld [vmem:[%s1 + $0x230] sm:$0xf]
      %v1286 = vld [vmem:[%s1 + $0x238] sm:$0xf]
      %v1287 = vld [vmem:[%s1 + $0x240] sm:$0xf]
      %v1288 = vld [vmem:[%s1 + $0x248] sm:$0xf]
      %v1289 = vld [vmem:[%s2 + $0x8] sm:$0x1]
      %v1290 = vlaneseq
      %v1291 = vshrl.u32 %v1290, 7
      %v1292 = vsub.s32 0, %v1291
      %v1293 = vrot.slane %v1289, %v1292
      %v1302 = vunpack.c.l.b16 %v1281
      %v1303 = vunpack.c.l.b16 %v1282
      %v1304 = vunpack.c.l.b16 %v1283
      %v1305 = vunpack.c.l.b16 %v1284
      %v1306 = vunpack.c.l.b16 %v1285
      %v1307 = vunpack.c.l.b16 %v1286
      %v1308 = vunpack.c.l.b16 %v1287
      %v1309 = vunpack.c.l.b16 %v1288
      %v1310 = vpack.c.b16 %v1303, %v1302
      %v1311 = vpack.c.b16 %v1305, %v1304
      %v1312 = vpack.c.b16 %v1307, %v1306
      %v1313 = vpack.c.b16 %v1309, %v1308
      %v1319 = vsel %vm395, %v1277, 0
      %v1322 = vsel %vm395, %v1278, 0
      %v1325 = vsel %vm395, %v1279, 0
      %v1328 = vsel %vm395, %v1280, 0
      %1330 = vmatprep.subr.bf16.mxu0 0
      %1331 = vmatpush1.bf16.msra.mxu0 0
      %1332 = vmatprep.subr.bf16.mxu0 0
      %1333 = vmatpush1.bf16.msra.mxu0 0
      %1334 = vmatprep.subr.bf16.mxu0 0
      %1335 = vmatpush1.bf16.msra.mxu0 0
      %1336 = vmatprep.subr.bf16.mxu0 0
      %1337 = vmatpush1.bf16.msra.mxu0 0
      %1338 = vmatprep.subr.bf16.mxu0 0
      %1339 = vmatpush1.bf16.msra.mxu0 %v1313
      %1340 = vmatprep.subr.bf16.mxu0 0
      %1341 = vmatpush1.bf16.msra.mxu0 %v1312
      %1342 = vmatprep.subr.bf16.mxu0 0
      %1343 = vmatpush1.bf16.msra.mxu0 %v1311
      %1344 = vmatprep.subr.bf16.mxu0 0
      %1345 = vmatpush1.bf16.msra.mxu0 %v1310
      %1346 = vmatprep.subr.bf16.mxu0 0
      %1347 = vmatpush2.bf16.msra.mxu0 0
      %1348 = vmatprep.subr.bf16.mxu0 0
      %1349 = vmatpush2.bf16.msra.mxu0 0
      %1350 = vmatprep.subr.bf16.mxu0 0
      %1351 = vmatpush2.bf16.msra.mxu0 0
      %1352 = vmatprep.subr.bf16.mxu0 0
      %1353 = vmatpush2.bf16.msra.mxu0 0
      %1354 = vmatprep.subr.bf16.mxu0 0
      %1355 = vmatpush2.bf16.msra.mxu0 0
      %1356 = vmatprep.subr.bf16.mxu0 0
      %1357 = vmatpush2.bf16.msra.mxu0 0
      %1358 = vmatprep.subr.bf16.mxu0 0
      %1359 = vmatpush2.bf16.msra.mxu0 0
      %1360 = vmatprep.subr.bf16.mxu0 0
      %1361 = vmatpush2.bf16.msra.mxu0 0
      %1362 = vmatprep.mubr.bf16.mxu0 0
      %1363 = vmatmul.mubr.bf16.gmra.mxu0 %v1319
      %v1364 = vpop.f32.mrf.mxu0
      %v1365 = vadd.f32 %v1293, %v1364
      %v1366 = vpop.f32.mrf.mxu0
      %v1367 = vpop.f32.mrf.mxu0
      %v1368 = vadd.f32 %v1293, %v1367
      %v1369 = vpop.f32.mrf.mxu0
      %1370 = vmatprep.mubr.bf16.mxu0 0
      %1371 = vmatmul.mubr.bf16.gmra.mxu0 %v1322
      %v1372 = vpop.f32.mrf.mxu0
      %v1373 = vadd.f32 %v1293, %v1372
      %v1374 = vpop.f32.mrf.mxu0
      %v1375 = vpop.f32.mrf.mxu0
      %v1376 = vadd.f32 %v1293, %v1375
      %v1377 = vpop.f32.mrf.mxu0
      %1378 = vmatprep.mubr.bf16.mxu0 0
      %1379 = vmatmul.mubr.bf16.gmra.mxu0 %v1325
      %v1380 = vpop.f32.mrf.mxu0
      %v1381 = vadd.f32 %v1293, %v1380
      %v1382 = vpop.f32.mrf.mxu0
      %v1383 = vpop.f32.mrf.mxu0
      %v1384 = vadd.f32 %v1293, %v1383
      %v1385 = vpop.f32.mrf.mxu0
      %1386 = vmatprep.mubr.bf16.mxu0 0
      %1387 = vmatmul.mubr.bf16.gmra.mxu0 %v1328
      %v1388 = vpop.f32.mrf.mxu0
      %v1389 = vadd.f32 %v1293, %v1388
      %v1390 = vpop.f32.mrf.mxu0
      %v1391 = vpop.f32.mrf.mxu0
      %v1392 = vadd.f32 %v1293, %v1391
      %v1393 = vpop.f32.mrf.mxu0
      %1394 = vdwg.mxu0
      %v1395 = vpack.c.bf16 %v1368, %v1365
      %v1396 = vpack.c.bf16 %v1376, %v1373
      %v1397 = vpack.c.bf16 %v1384, %v1381
      %v1398 = vpack.c.bf16 %v1392, %v1389
      %v1399 = vld [vmem:[%s1 + $0x250] sm:$0xf]
      %v1400 = vld [vmem:[%s1 + $0x258] sm:$0xf]
      %v1401 = vld [vmem:[%s1 + $0x260] sm:$0xf]
      %v1402 = vld [vmem:[%s1 + $0x268] sm:$0xf]
      %v1403 = vld [vmem:[%s1 + $0x270] sm:$0xf]
      %v1404 = vld [vmem:[%s1 + $0x278] sm:$0xf]
      %v1405 = vld [vmem:[%s1 + $0x280] sm:$0xf]
      %v1406 = vld [vmem:[%s1 + $0x288] sm:$0xf]
      %v1415 = vunpack.c.l.b16 %v1399
      %v1416 = vunpack.c.l.b16 %v1400
      %v1417 = vunpack.c.l.b16 %v1401
      %v1418 = vunpack.c.l.b16 %v1402
      %v1419 = vunpack.c.l.b16 %v1403
      %v1420 = vunpack.c.l.b16 %v1404
      %v1421 = vunpack.c.l.b16 %v1405
      %v1422 = vunpack.c.l.b16 %v1406
      %v1423 = vpack.c.b16 %v1416, %v1415
      %v1424 = vpack.c.b16 %v1418, %v1417
      %v1425 = vpack.c.b16 %v1420, %v1419
      %v1426 = vpack.c.b16 %v1422, %v1421
      %v1432 = vsel %vm395, %v1395, 0
      %v1435 = vsel %vm395, %v1396, 0
      %v1438 = vsel %vm395, %v1397, 0
      %v1441 = vsel %vm395, %v1398, 0
      %1443 = vmatprep.subr.bf16.mxu0 0
      %1444 = vmatpush1.bf16.msra.mxu0 0
      %1445 = vmatprep.subr.bf16.mxu0 0
      %1446 = vmatpush1.bf16.msra.mxu0 0
      %1447 = vmatprep.subr.bf16.mxu0 0
      %1448 = vmatpush1.bf16.msra.mxu0 0
      %1449 = vmatprep.subr.bf16.mxu0 0
      %1450 = vmatpush1.bf16.msra.mxu0 0
      %1451 = vmatprep.subr.bf16.mxu0 0
      %1452 = vmatpush1.bf16.msra.mxu0 %v1426
      %1453 = vmatprep.subr.bf16.mxu0 0
      %1454 = vmatpush1.bf16.msra.mxu0 %v1425
      %1455 = vmatprep.subr.bf16.mxu0 0
      %1456 = vmatpush1.bf16.msra.mxu0 %v1424
      %1457 = vmatprep.subr.bf16.mxu0 0
      %1458 = vmatpush1.bf16.msra.mxu0 %v1423
      %1459 = vmatprep.subr.bf16.mxu0 0
      %1460 = vmatpush2.bf16.msra.mxu0 0
      %1461 = vmatprep.subr.bf16.mxu0 0
      %1462 = vmatpush2.bf16.msra.mxu0 0
      %1463 = vmatprep.subr.bf16.mxu0 0
      %1464 = vmatpush2.bf16.msra.mxu0 0
      %1465 = vmatprep.subr.bf16.mxu0 0
      %1466 = vmatpush2.bf16.msra.mxu0 0
      %1467 = vmatprep.subr.bf16.mxu0 0
      %1468 = vmatpush2.bf16.msra.mxu0 0
      %1469 = vmatprep.subr.bf16.mxu0 0
      %1470 = vmatpush2.bf16.msra.mxu0 0
      %1471 = vmatprep.subr.bf16.mxu0 0
      %1472 = vmatpush2.bf16.msra.mxu0 0
      %1473 = vmatprep.subr.bf16.mxu0 0
      %1474 = vmatpush2.bf16.msra.mxu0 0
      %1475 = vmatprep.mubr.bf16.mxu0 0
      %1476 = vmatmul.mubr.bf16.gmra.mxu0 %v1432
      %v1477 = vpop.f32.mrf.mxu0
      %v1478 = vadd.f32 %v297, %v1477
      %v1479 = vpop.f32.mrf.mxu0
      %v1480 = vpop.f32.mrf.mxu0
      %v1481 = vadd.f32 %v301, %v1480
      %v1482 = vpop.f32.mrf.mxu0
      %1483 = vmatprep.mubr.bf16.mxu0 0
      %1484 = vmatmul.mubr.bf16.gmra.mxu0 %v1435
      %v1485 = vpop.f32.mrf.mxu0
      %v1486 = vadd.f32 %v307, %v1485
      %v1487 = vpop.f32.mrf.mxu0
      %v1488 = vpop.f32.mrf.mxu0
      %v1489 = vadd.f32 %v311, %v1488
      %v1490 = vpop.f32.mrf.mxu0
      %1491 = vmatprep.mubr.bf16.mxu0 0
      %1492 = vmatmul.mubr.bf16.gmra.mxu0 %v1438
      %v1493 = vpop.f32.mrf.mxu0
      %v1494 = vadd.f32 %v317, %v1493
      %v1495 = vpop.f32.mrf.mxu0
      %v1496 = vpop.f32.mrf.mxu0
      %v1497 = vadd.f32 %v321, %v1496
      %v1498 = vpop.f32.mrf.mxu0
      %1499 = vmatprep.mubr.bf16.mxu0 0
      %1500 = vmatmul.mubr.bf16.gmra.mxu0 %v1441
      %v1501 = vpop.f32.mrf.mxu0
      %v1502 = vadd.f32 %v327, %v1501
      %v1503 = vpop.f32.mrf.mxu0
      %v1504 = vpop.f32.mrf.mxu0
      %v1505 = vadd.f32 %v331, %v1504
      %v1506 = vpop.f32.mrf.mxu0
      %1507 = vdwg.mxu0
      %v1508 = vld [vmem:[%s2 + $0x9] sm:$0x1]
      %v1509 = vlaneseq
      %v1510 = vshrl.u32 %v1509, 7
      %v1511 = vsub.s32 0, %v1510
      %v1512 = vrot.slane %v1508, %v1511
      %v1513 = vadd.f32 %v1478, %v1512
      %v1514 = vadd.f32 %v1481, %v1512
      %v1515 = vadd.f32 %v1486, %v1512
      %v1516 = vadd.f32 %v1489, %v1512
      %v1517 = vadd.f32 %v1494, %v1512
      %v1518 = vadd.f32 %v1497, %v1512
      %v1519 = vadd.f32 %v1502, %v1512
      %v1520 = vadd.f32 %v1505, %v1512
      %v1521 = vmax.f32 %v1513, 0.0
      %v1522 = vmax.f32 %v1514, 0.0
      %v1523 = vmax.f32 %v1515, 0.0
      %v1524 = vmax.f32 %v1516, 0.0
      %v1525 = vmax.f32 %v1517, 0.0
      %v1526 = vmax.f32 %v1518, 0.0
      %v1527 = vmax.f32 %v1519, 0.0
      %v1528 = vmax.f32 %v1520, 0.0
      %v1529 = vpack.c.bf16 %v1522, %v1521
      %v1530 = vpack.c.bf16 %v1524, %v1523
      %v1531 = vpack.c.bf16 %v1526, %v1525
      %v1532 = vpack.c.bf16 %v1528, %v1527
      %v1533 = vld [vmem:[%s1 + $0x290] sm:$0xf]
      %v1534 = vld [vmem:[%s1 + $0x298] sm:$0xf]
      %v1535 = vld [vmem:[%s1 + $0x2a0] sm:$0xf]
      %v1536 = vld [vmem:[%s1 + $0x2a8] sm:$0xf]
      %v1537 = vld [vmem:[%s1 + $0x2b0] sm:$0xf]
      %v1538 = vld [vmem:[%s1 + $0x2b8] sm:$0xf]
      %v1539 = vld [vmem:[%s1 + $0x2c0] sm:$0xf]
      %v1540 = vld [vmem:[%s1 + $0x2c8] sm:$0xf]
      %v1541 = vld [vmem:[%s2 + $0xa] sm:$0x1]
      %v1542 = vlaneseq
      %v1543 = vshrl.u32 %v1542, 7
      %v1544 = vsub.s32 0, %v1543
      %v1545 = vrot.slane %v1541, %v1544
      %v1554 = vunpack.c.l.b16 %v1533
      %v1555 = vunpack.c.l.b16 %v1534
      %v1556 = vunpack.c.l.b16 %v1535
      %v1557 = vunpack.c.l.b16 %v1536
      %v1558 = vunpack.c.l.b16 %v1537
      %v1559 = vunpack.c.l.b16 %v1538
      %v1560 = vunpack.c.l.b16 %v1539
      %v1561 = vunpack.c.l.b16 %v1540
      %v1562 = vpack.c.b16 %v1555, %v1554
      %v1563 = vpack.c.b16 %v1557, %v1556
      %v1564 = vpack.c.b16 %v1559, %v1558
      %v1565 = vpack.c.b16 %v1561, %v1560
      %v1571 = vsel %vm395, %v1529, 0
      %v1574 = vsel %vm395, %v1530, 0
      %v1577 = vsel %vm395, %v1531, 0
      %v1580 = vsel %vm395, %v1532, 0
      %1582 = vmatprep.subr.bf16.mxu0 0
      %1583 = vmatpush1.bf16.msra.mxu0 0
      %1584 = vmatprep.subr.bf16.mxu0 0
      %1585 = vmatpush1.bf16.msra.mxu0 0
      %1586 = vmatprep.subr.bf16.mxu0 0
      %1587 = vmatpush1.bf16.msra.mxu0 0
      %1588 = vmatprep.subr.bf16.mxu0 0
      %1589 = vmatpush1.bf16.msra.mxu0 0
      %1590 = vmatprep.subr.bf16.mxu0 0
      %1591 = vmatpush1.bf16.msra.mxu0 %v1565
      %1592 = vmatprep.subr.bf16.mxu0 0
      %1593 = vmatpush1.bf16.msra.mxu0 %v1564
      %1594 = vmatprep.subr.bf16.mxu0 0
      %1595 = vmatpush1.bf16.msra.mxu0 %v1563
      %1596 = vmatprep.subr.bf16.mxu0 0
      %1597 = vmatpush1.bf16.msra.mxu0 %v1562
      %1598 = vmatprep.subr.bf16.mxu0 0
      %1599 = vmatpush2.bf16.msra.mxu0 0
      %1600 = vmatprep.subr.bf16.mxu0 0
      %1601 = vmatpush2.bf16.msra.mxu0 0
      %1602 = vmatprep.subr.bf16.mxu0 0
      %1603 = vmatpush2.bf16.msra.mxu0 0
      %1604 = vmatprep.subr.bf16.mxu0 0
      %1605 = vmatpush2.bf16.msra.mxu0 0
      %1606 = vmatprep.subr.bf16.mxu0 0
      %1607 = vmatpush2.bf16.msra.mxu0 0
      %1608 = vmatprep.subr.bf16.mxu0 0
      %1609 = vmatpush2.bf16.msra.mxu0 0
      %1610 = vmatprep.subr.bf16.mxu0 0
      %1611 = vmatpush2.bf16.msra.mxu0 0
      %1612 = vmatprep.subr.bf16.mxu0 0
      %1613 = vmatpush2.bf16.msra.mxu0 0
      %1614 = vmatprep.mubr.bf16.mxu0 0
      %1615 = vmatmul.mubr.bf16.gmra.mxu0 %v1571
      %v1616 = vpop.f32.mrf.mxu0
      %v1617 = vadd.f32 %v1545, %v1616
      %v1618 = vpop.f32.mrf.mxu0
      %v1619 = vpop.f32.mrf.mxu0
      %v1620 = vadd.f32 %v1545, %v1619
      %v1621 = vpop.f32.mrf.mxu0
      %1622 = vmatprep.mubr.bf16.mxu0 0
      %1623 = vmatmul.mubr.bf16.gmra.mxu0 %v1574
      %v1624 = vpop.f32.mrf.mxu0
      %v1625 = vadd.f32 %v1545, %v1624
      %v1626 = vpop.f32.mrf.mxu0
      %v1627 = vpop.f32.mrf.mxu0
      %v1628 = vadd.f32 %v1545, %v1627
      %v1629 = vpop.f32.mrf.mxu0
      %1630 = vmatprep.mubr.bf16.mxu0 0
      %1631 = vmatmul.mubr.bf16.gmra.mxu0 %v1577
      %v1632 = vpop.f32.mrf.mxu0
      %v1633 = vadd.f32 %v1545, %v1632
      %v1634 = vpop.f32.mrf.mxu0
      %v1635 = vpop.f32.mrf.mxu0
      %v1636 = vadd.f32 %v1545, %v1635
      %v1637 = vpop.f32.mrf.mxu0
      %1638 = vmatprep.mubr.bf16.mxu0 0
      %1639 = vmatmul.mubr.bf16.gmra.mxu0 %v1580
      %v1640 = vpop.f32.mrf.mxu0
      %v1641 = vadd.f32 %v1545, %v1640
      %v1642 = vpop.f32.mrf.mxu0
      %v1643 = vpop.f32.mrf.mxu0
      %v1644 = vadd.f32 %v1545, %v1643
      %v1645 = vpop.f32.mrf.mxu0
      %1646 = vdwg.mxu0
      %v1647 = vxor.u32 %v1617, 2147483648
      %v1648 = vxor.u32 %v1620, 2147483648
      %v1649 = vxor.u32 %v1625, 2147483648
      %v1650 = vxor.u32 %v1628, 2147483648
      %v1651 = vxor.u32 %v1633, 2147483648
      %v1652 = vxor.u32 %v1636, 2147483648
      %v1653 = vxor.u32 %v1641, 2147483648
      %v1654 = vxor.u32 %v1644, 2147483648
      %v1655 = vmul.f32 %v1647, 1.442695
      %v1656 = vpow.pop %v1655
      %v1657 = vmul.f32 %v1648, 1.442695
      %v1658 = vpow.pop %v1657
      %v1659 = vmul.f32 %v1649, 1.442695
      %v1660 = vpow.pop %v1659
      %v1661 = vmul.f32 %v1650, 1.442695
      %v1662 = vpow.pop %v1661
      %v1663 = vmul.f32 %v1651, 1.442695
      %v1664 = vpow.pop %v1663
      %v1665 = vmul.f32 %v1652, 1.442695
      %v1666 = vpow.pop %v1665
      %v1667 = vmul.f32 %v1653, 1.442695
      %v1668 = vpow.pop %v1667
      %v1669 = vmul.f32 %v1654, 1.442695
      %v1670 = vpow.pop %v1669
      %v1671 = vadd.f32 %v1656, 1.0
      %v1672 = vadd.f32 %v1658, 1.0
      %v1673 = vadd.f32 %v1660, 1.0
      %v1674 = vadd.f32 %v1662, 1.0
      %v1675 = vadd.f32 %v1664, 1.0
      %v1676 = vadd.f32 %v1666, 1.0
      %v1677 = vadd.f32 %v1668, 1.0
      %v1678 = vadd.f32 %v1670, 1.0
      %v1679 = vrcp.pop %v1671
      %v1680 = vmul.f32 1.0, %v1679
      %v1681 = vrcp.pop %v1672
      %v1682 = vmul.f32 1.0, %v1681
      %v1683 = vrcp.pop %v1673
      %v1684 = vmul.f32 1.0, %v1683
      %v1685 = vrcp.pop %v1674
      %v1686 = vmul.f32 1.0, %v1685
      %v1687 = vrcp.pop %v1675
      %v1688 = vmul.f32 1.0, %v1687
      %v1689 = vrcp.pop %v1676
      %v1690 = vmul.f32 1.0, %v1689
      %v1691 = vrcp.pop %v1677
      %v1692 = vmul.f32 1.0, %v1691
      %v1693 = vrcp.pop %v1678
      %v1694 = vmul.f32 1.0, %v1693
      %vm1695 = vcmask 48128
      %1696 = vst.msk [vmem:[%s172] sm:$0xff] %vm1695, %v1680
      %1697 = vst.msk [vmem:[%s172 + $0x8] sm:$0xff] %vm1695, %v1682
      %1698 = vst.msk [vmem:[%s172 + $0x10] sm:$0xff] %vm1695, %v1684
      %1699 = vst.msk [vmem:[%s172 + $0x18] sm:$0xff] %vm1695, %v1686
      %1700 = vst.msk [vmem:[%s172 + $0x20] sm:$0xff] %vm1695, %v1688
      %1701 = vst.msk [vmem:[%s172 + $0x28] sm:$0xff] %vm1695, %v1690
      %1702 = vst.msk [vmem:[%s172 + $0x30] sm:$0xff] %vm1695, %v1692
      %1703 = vst.msk [vmem:[%s172 + $0x38] sm:$0xff] %vm1695, %v1694
      %s1704 = smul.u32 8, %s14
      %p1705 = scmp.lt.s32.totalorder %s1704, 15
      %s1706 = scalar_select %p1705, %s1704, 15
      %s1707 = smul.addr %s1706, 8
      %s1708 = scalar_lea.vmem %s3, %s1707
      // Predicated region
      $region33: #{tpu_custom_call.1} parent=31 // pred_check
        %p1709 = pneg %p100
      $region34: #{tpu_custom_call.1} parent=31 // pred_check_branch
        %1711 = sbr.rel (%p1709) target = $region36
      $region35: #{tpu_custom_call.1} parent=31 // pred_region
        %s1712 = smul.u32 8, %s14
      $region36: #{tpu_custom_call.1} parent=31 // pred_fallthru
        _
    $region32: #{tpu_custom_call.1} parent=5 // pred_fallthru
      _
    %p1713 = scmp.le.s32.totalorder 2, %s9
    // Predicated region
    $region37: #{tpu_custom_call.1} parent=5 // pred_check
      %p1714 = pneg %p1713
    $region38: #{tpu_custom_call.1} parent=5 // pred_check_branch
      %1716 = sbr.rel (%p1714) target = $region40
    $region39: #{tpu_custom_call.1} parent=5 // pred_region
      %s1717 = ssub.s32 %s9, 2
      // Predicated region
      $region41: #{tpu_custom_call.1} parent=39 // pred_check
        %p1718 = pneg %p106
      $region42: #{tpu_custom_call.1} parent=39 // pred_check_branch
        %1720 = sbr.rel (%p1718) target = $region44
      $region43: #{tpu_custom_call.1} parent=39 // pred_region
        %s1721 = smul.u32 8, %s15
        %p1722 = scmp.lt.s32.totalorder %s1721, 15
        %s1723 = scalar_select %p1722, %s1721, 15
        %s1724 = smul.addr %s1723, 8
        %s1725 = scalar_lea.vmem %s3, %s1724
      $region44: #{tpu_custom_call.1} parent=39 // pred_fallthru
        _
    $region40: #{tpu_custom_call.1} parent=5 // pred_fallthru
      _
  $region6: #{tpu_custom_call.1} parent=0 // loop_footer
    %s13 = sadd.s32 1, %s9
  $region7: #{tpu_custom_call.1} parent=0 // loop_footer_branch
    %8 = sbr.rel target = $region3
  $region8: #{tpu_custom_call.1} parent=0 // loop_exit
    _

</llo_original>
